<compile_context>
chip_gen: v7x
topology: tpu7x:2x2x1
jax: 0.10.0
libtpu: 0.0.40
codegen_flags: <defaults>
</compile_context>

<pallas_src>
import functools

import numpy as np
import jax
import jax.numpy as jnp
from jax import lax
from jax.experimental import pallas as pl
from jax.experimental.pallas import tpu as pltpu


# ----------------------------------------------------------------------------
# Pallas kernel: grid_sample(bilinear, align_corners=True, zero padding) +
# bounding-masked sum over cameras, normalization, nan->0, clamp to [0, 1].
# ----------------------------------------------------------------------------
def _voxel_project_kernel(sg_ref, bound_ref, invden_ref, feat_ref, out_ref,
                          *, hm_w, hm_h, hw_tile, hw_chunks, compute_dtype):
    # sg_ref:     (2, NB_TILE)             normalized sample grid (x row, y row)
    # bound_ref:  (1, NB_TILE)             in-view mask for this (batch, camera)
    # invden_ref: (1, NB_TILE)             1 / (sum_cam bound + 1e-6)
    # feat_ref:   (hw_chunks, C, HW_TILE)  chunked flattened heatmap
    # out_ref:    (C, NB_TILE)             fused voxel features (resident over cams)
    cam = pl.program_id(2)
    n_cams = pl.num_programs(2)
    C, nb_t = out_ref.shape

    sgx = sg_ref[0:1, :]                                   # (1, NB_TILE)
    sgy = sg_ref[1:2, :]
    # F.grid_sample denormalization with align_corners=True
    ix = (sgx + 1.0) * (0.5 * (hm_w - 1))
    iy = (sgy + 1.0) * (0.5 * (hm_h - 1))
    x0f = jnp.floor(ix)
    y0f = jnp.floor(iy)
    wx1 = ix - x0f
    wx0 = 1.0 - wx1
    wy1 = iy - y0f
    wy0 = 1.0 - wy1
    x0 = x0f.astype(jnp.int32)
    y0 = y0f.astype(jnp.int32)
    x1 = x0 + 1
    y1 = y0 + 1

    bound = bound_ref[...]                                 # (1, NB_TILE) f32

    def corner(xi, yi, w):
        # zero-padding grid_sample: out-of-bounds corners are masked *on the
        # weight* (so flat-index aliasing of OOB corners is harmless).  The
        # per-camera bounding mask is folded in here as a column scale of S.
        valid = (xi >= 0) & (xi < hm_w) & (yi >= 0) & (yi < hm_h)
        wv = jnp.where(valid, w * bound, 0.0).astype(compute_dtype)
        flat = yi * hm_w + xi                              # (1, NB_TILE) i32
        return flat, wv

    f00, w00 = corner(x0, y0, wy0 * wx0)
    f10, w10 = corner(x1, y0, wy0 * wx1)
    f01, w01 = corner(x0, y1, wy1 * wx0)
    f11, w11 = corner(x1, y1, wy1 * wx1)

    zero = jnp.zeros((), compute_dtype)
    iota = lax.broadcasted_iota(jnp.int32, (hw_tile, nb_t), 0)

    def hw_body(k, sampled):
        base = k * hw_tile
        # one-hot bilinear interpolation matrix for this pixel chunk
        S = (jnp.where(iota == (f00 - base), w00, zero) +
             jnp.where(iota == (f10 - base), w10, zero) +
             jnp.where(iota == (f01 - base), w01, zero) +
             jnp.where(iota == (f11 - base), w11, zero))   # (HW_TILE, NB_TILE)
        return sampled + jnp.dot(feat_ref[k], S,
                                 preferred_element_type=jnp.float32)

    sampled = lax.fori_loop(0, hw_chunks, hw_body,
                            jnp.zeros((C, nb_t), jnp.float32),
                            unroll=(hw_chunks <= 2))

    @pl.when(cam == 0)
    def _():
        out_ref[...] = sampled                             # assign: no zero-fill

    @pl.when(cam > 0)
    def _():
        out_ref[...] += sampled

    @pl.when(cam == n_cams - 1)
    def _():
        cubes = out_ref[...] * invden_ref[...]
        cubes = jnp.where(cubes != cubes, 0.0, cubes)      # NaN -> 0 (torch parity)
        out_ref[...] = jnp.clip(cubes, 0.0, 1.0)


def _device_kind():
    try:
        return jax.devices()[0].device_kind.lower()
    except Exception:
        return ""


def _round_up(x, m):
    return ((x + m - 1) // m) * m


def fuse_voxel_features(sample_grid, bounding, feats, hm_w, hm_h,
                        nb_tile_target=None, hw_tile_target=None,
                        compute_dtype=None):
    """sample_grid [B,n,2,NB], bounding [B,n,1,NB], feats [B,n,C,HW] -> [B,C,NB]."""
    B, n, _, NB = sample_grid.shape
    C, HW = feats.shape[2], feats.shape[3]

    kind = _device_kind()
    is_v7 = "v7" in kind
    if compute_dtype is None:
        # bf16 S/feat on v6e/v7x (packed VPU + native MXU); f32 on v5e and older.
        compute_dtype = jnp.bfloat16 if ("v6" in kind or "v7" in kind) else jnp.float32
    if nb_tile_target is None:
        nb_tile_target = 1024 if is_v7 else 2048   # halved S/out tiles on v7x (64 MiB VMEM)
    if hw_tile_target is None:
        hw_tile_target = 2048

    nb_tile = min(_round_up(NB, 128), nb_tile_target)
    NB_pad = _round_up(NB, nb_tile)
    hw_tile = min(_round_up(HW, 128), hw_tile_target)
    HW_pad = _round_up(HW, hw_tile)
    hw_chunks = HW_pad // hw_tile
    nb_grid = NB_pad // nb_tile

    # Pad the voxel-bin axis (padded bins have bound=0 -> contribute nothing).
    sg_p = jnp.pad(sample_grid.astype(jnp.float32),
                   ((0, 0), (0, 0), (0, 0), (0, NB_pad - NB)))
    bnd_p = jnp.pad(bounding.astype(jnp.float32),
                    ((0, 0), (0, 0), (0, 0), (0, NB_pad - NB)))
    # Denominator moved out of the kernel: one reciprocal per (b, voxel).
    inv_den = 1.0 / (jnp.sum(bnd_p, axis=1) + 1e-6)                   # [B,1,NB_pad]
    # Pad + pre-chunk the pixel axis; zero padding never carries weight.
    feats_p = jnp.pad(feats.astype(jnp.float32),
                      ((0, 0), (0, 0), (0, 0), (0, HW_pad - HW)))
    feats_p = feats_p.reshape(B, n, C, hw_chunks, hw_tile).transpose(0, 1, 3, 2, 4)
    feats_p = feats_p.astype(compute_dtype)                           # [B,n,hc,C,hw_tile]

    kernel = functools.partial(_voxel_project_kernel, hm_w=hm_w, hm_h=hm_h,
                               hw_tile=hw_tile, hw_chunks=hw_chunks,
                               compute_dtype=compute_dtype)

    # Rough VMEM budget for this tiling (S temporaries + double-buffered blocks).
    dt_b = jnp.dtype(compute_dtype).itemsize
    s_bytes = hw_tile * nb_tile * dt_b
    feat_blk = hw_chunks * C * hw_tile * dt_b
    out_blk = C * nb_tile * 4
    small_blk = 4 * nb_tile * 4
    est = 2 * s_bytes + 2 * feat_blk + 2 * out_blk + 2 * small_blk + C * nb_tile * 4
    cap = (48 << 20) if is_v7 else (100 << 20)
    vmem_limit = int(min(max(2 * est, 32 << 20), cap))

    out = pl.pallas_call(
        kernel,
        out_shape=jax.ShapeDtypeStruct((B, C, NB_pad), jnp.float32),
        grid_spec=pltpu.PrefetchScalarGridSpec(
            num_scalar_prefetch=0,
            grid=(B, nb_grid, n),                 # cameras = reduction axis (last)
            in_specs=[
                pl.BlockSpec((None, None, 2, nb_tile), lambda b, q, c: (b, c, 0, q)),
                pl.BlockSpec((None, None, 1, nb_tile), lambda b, q, c: (b, c, 0, q)),
                pl.BlockSpec((None, 1, nb_tile), lambda b, q, c: (b, 0, q)),
                pl.BlockSpec((None, None, hw_chunks, C, hw_tile),
                             lambda b, q, c: (b, c, 0, 0, 0)),
            ],
            out_specs=pl.BlockSpec((None, C, nb_tile), lambda b, q, c: (b, 0, q)),
        ),
        compiler_params=pltpu.CompilerParams(
            dimension_semantics=("parallel", "parallel", "arbitrary"),
            vmem_limit_bytes=vmem_limit),
    )(sg_p, bnd_p, inv_den, feats_p)
    return out[:, :, :NB]


# ----------------------------------------------------------------------------
# ProjectLayer wrapper (geometry glue in plain JAX, sampling/fusion in Pallas).
# ----------------------------------------------------------------------------
class ProjectLayerPallas:
    def __init__(self, image_size, heatmap_size):
        if isinstance(image_size, int):
            image_size = [image_size, image_size]
        if isinstance(heatmap_size, int):
            heatmap_size = [heatmap_size, heatmap_size]
        self.image_size = list(image_size)      # [W_img, H_img]
        self.heatmap_size = list(heatmap_size)  # [w, h]

    def compute_grid(self, box_size, box_center, num_bins):
        if isinstance(box_size, (int, float)):
            box_size = [box_size] * 3
        if isinstance(num_bins, int):
            num_bins = [num_bins] * 3
        gx = jnp.linspace(-box_size[0] / 2.0, box_size[0] / 2.0, num_bins[0]) + box_center[0]
        gy = jnp.linspace(-box_size[1] / 2.0, box_size[1] / 2.0, num_bins[1]) + box_center[1]
        gz = jnp.linspace(-box_size[2] / 2.0, box_size[2] / 2.0, num_bins[2]) + box_center[2]
        X, Y, Z = jnp.meshgrid(gx, gy, gz, indexing='ij')
        return jnp.stack([X.reshape(-1), Y.reshape(-1), Z.reshape(-1)], axis=-1)  # [NB, 3]

    def __call__(self, feature_maps, meta, grid_size, grid_center, cube_size):
        B, C = feature_maps[0].shape[0], feature_maps[0].shape[1]
        n = len(feature_maps)
        w_hm, h_hm = self.heatmap_size
        img_w, img_h = self.image_size
        NB = cube_size[0] * cube_size[1] * cube_size[2]

        gc = jnp.asarray(grid_center, jnp.float32)
        if gc.shape[0] == 1:
            gc = jnp.broadcast_to(gc, (B, gc.shape[1]))
        # TODO(synk): per-sample skip branch (grid_center[i][3] < 0) not implemented.

        grids = jax.vmap(
            lambda ctr: self.compute_grid(grid_size, ctr, list(cube_size)))(gc[:, :3])  # [B,NB,3]

        R = meta['R']            # [B,n,3,3] world->camera rotation
        T = meta['T']            # [B,n,3]   camera position in world
        f = meta['f']            # [B,n,2]   focal lengths
        pp = meta['c']           # [B,n,2]   principal point
        center = meta['center']  # [B,n,2]   bbox center (original image pixels)
        scale = meta['scale']    # [B,n,2]   bbox size   (original image pixels)

        # pinhole world->pixel (SimpleCameraTorch without k/p distortion)
        Xs = grids[:, None, :, :] - T[:, :, None, :]                     # [B,n,NB,3]
        Xc = jnp.einsum('bnqk,bnjk->bnqj', Xs, R)                        # [B,n,NB,3]
        xy = Xc[..., :2] / Xc[..., 2:3] * f[:, :, None, :] + pp[:, :, None, :]  # [B,n,NB,2]

        width = center[..., 0] * 2.0                                     # [B,n]
        height = center[..., 1] * 2.0
        bounding = ((xy[..., 0] >= 0) & (xy[..., 1] >= 0) &
                    (xy[..., 0] < width[..., None]) &
                    (xy[..., 1] < height[..., None])).astype(jnp.float32)  # [B,n,NB]

        max_wh = jnp.maximum(width, height)[..., None, None]
        xy = jnp.clip(xy, -1.0, max_wh)

        # get_affine_transform(center, scale/200, rot=0, image_size):
        # uniform scale s = img_w / scale_w, mapping bbox center -> image center.
        s = img_w / scale[..., 0]                                        # [B,n]
        ax = xy[..., 0] * s[..., None] + (img_w / 2.0 - s * center[..., 0])[..., None]
        ay = xy[..., 1] * s[..., None] + (img_h / 2.0 - s * center[..., 1])[..., None]

        # to heatmap coords, then to normalized grid_sample coords
        hx = ax * float(w_hm) / float(img_w)
        hy = ay * float(h_hm) / float(img_h)
        sgx = hx / float(w_hm - 1) * 2.0 - 1.0
        sgy = hy / float(h_hm - 1) * 2.0 - 1.0
        sample_grid = jnp.clip(jnp.stack([sgx, sgy], axis=2), -1.1, 1.1)  # [B,n,2,NB]

        feats = jnp.stack(feature_maps, axis=1).reshape(B, n, C, h_hm * w_hm).astype(jnp.float32)
        bnd = bounding[:, :, None, :]                                     # [B,n,1,NB]

        cubes = fuse_voxel_features(sample_grid, bnd, feats, w_hm, h_hm)  # [B,C,NB]
        cubes = cubes.reshape(B, C, cube_size[0], cube_size[1], cube_size[2])
        return cubes, grids


# ----------------------------------------------------------------------------
# Pure-JAX reference of the sampling/fusion path (for a correctness check).
# ----------------------------------------------------------------------------
def _reference_fuse(sample_grid, bounding, feats, hm_w, hm_h):
    B, n, C, HW = feats.shape
    NB = sample_grid.shape[-1]
    ix = (sample_grid[:, :, 0, :] + 1.0) * 0.5 * (hm_w - 1)
    iy = (sample_grid[:, :, 1, :] + 1.0) * 0.5 * (hm_h - 1)
    x0 = jnp.floor(ix)
    y0 = jnp.floor(iy)
    wx1, wx0 = ix - x0, 1.0 - (ix - x0)
    wy1, wy0 = iy - y0, 1.0 - (iy - y0)

    def tap(xf, yf, w):
        xi = xf.astype(jnp.int32)
        yi = yf.astype(jnp.int32)
        valid = ((xi >= 0) & (xi < hm_w) & (yi >= 0) & (yi < hm_h)).astype(jnp.float32)
        xi = jnp.clip(xi, 0, hm_w - 1)
        yi = jnp.clip(yi, 0, hm_h - 1)
        flat = jnp.broadcast_to((yi * hm_w + xi)[:, :, None, :], (B, n, C, NB))
        vals = jnp.take_along_axis(feats, flat, axis=-1)
        return vals * (w * valid)[:, :, None, :]

    sampled = (tap(x0, y0, wy0 * wx0) + tap(x0 + 1, y0, wy0 * wx1) +
               tap(x0, y0 + 1, wy1 * wx0) + tap(x0 + 1, y0 + 1, wy1 * wx1))
    num = jnp.sum(sampled * bounding, axis=1)
    den = jnp.sum(bounding, axis=1) + 1e-6
    cubes = num / den
    cubes = jnp.where(jnp.isnan(cubes), 0.0, cubes)
    return jnp.clip(cubes, 0.0, 1.0)


if __name__ == "__main__":
    key = jax.random.PRNGKey(0)
    B, C, n = 2, 4, 3
    image_size = [64, 64]
    heatmap_size = [16, 16]
    cube_size = [8, 8, 8]
    grid_size = [4000.0, 4000.0, 2000.0]
    grid_center = [[0.0, 0.0, 1000.0]]        # shared across batch (len == 1 path)

    # deterministic heatmap-like features in [0, 1]   (NCHW, PyTorch convention)
    keys = jax.random.split(key, n)
    feature_maps = [jax.random.uniform(keys[i], (B, C, heatmap_size[1], heatmap_size[0]),
                                       dtype=jnp.float32) for i in range(n)]

    # deterministic synthetic cameras looking at the grid center
    def look_at(pos, target):
        pos = np.asarray(pos, np.float64)
        target = np.asarray(target, np.float64)
        fwd = target - pos
        fwd /= np.linalg.norm(fwd)
        up = np.array([0.0, 0.0, 1.0])
        right = np.cross(fwd, up)
        right /= np.linalg.norm(right)
        down = np.cross(fwd, right)
        return np.stack([right, down, fwd], axis=0)      # rows = camera axes (world->cam)

    cam_pos = [[5000.0, 0.0, 1500.0], [-2500.0, 4330.0, 1500.0], [-2500.0, -4330.0, 1500.0]]
    Rs = np.stack([look_at(p, [0.0, 0.0, 1000.0]) for p in cam_pos]).astype(np.float32)
    Ts = np.asarray(cam_pos, np.float32)
    fs = np.full((n, 2), 300.0, np.float32)
    cs = np.full((n, 2), 128.0, np.float32)              # original image is 256x256
    centers = np.full((B, n, 2), 128.0, np.float32)      # bbox center -> width=height=256
    scales = np.full((B, n, 2), 256.0, np.float32)       # bbox size in px (torch passes /200)

    meta = {
        'R': jnp.asarray(np.broadcast_to(Rs, (B, n, 3, 3))),
        'T': jnp.asarray(np.broadcast_to(Ts, (B, n, 3))),
        'f': jnp.asarray(np.broadcast_to(fs, (B, n, 2))),
        'c': jnp.asarray(np.broadcast_to(cs, (B, n, 2))),
        'center': jnp.asarray(centers),
        'scale': jnp.asarray(scales),
    }

    layer = ProjectLayerPallas(image_size, heatmap_size)
    cubes, grids = layer(feature_maps, meta, grid_size, grid_center, cube_size)
    cubes, grids = jax.block_until_ready((cubes, grids))

    NB = cube_size[0] * cube_size[1] * cube_size[2]
    assert cubes.shape == (B, C, cube_size[0], cube_size[1], cube_size[2])
    assert grids.shape == (B, NB, 3)
    assert bool(jnp.all(jnp.isfinite(cubes)))
    assert bool(jnp.all((cubes >= 0.0) & (cubes <= 1.0)))

    # cross-check the kernel against the pure-JAX reference of the same math
    w_hm, h_hm = heatmap_size
    gc = jnp.broadcast_to(jnp.asarray(grid_center, jnp.float32), (B, 3))
    grids_ref = jax.vmap(lambda c3: layer.compute_grid(grid_size, c3, cube_size))(gc)
    Xs = grids_ref[:, None, :, :] - meta['T'][:, :, None, :]
    Xc = jnp.einsum('bnqk,bnjk->bnqj', Xs, meta['R'])
    xy = Xc[..., :2] / Xc[..., 2:3] * meta['f'][:, :, None, :] + meta['c'][:, :, None, :]
    width = meta['center'][..., 0] * 2.0
    height = meta['center'][..., 1] * 2.0
    bnd = ((xy[..., 0] >= 0) & (xy[..., 1] >= 0) &
           (xy[..., 0] < width[..., None]) & (xy[..., 1] < height[..., None])).astype(jnp.float32)
    xy = jnp.clip(xy, -1.0, jnp.maximum(width, height)[..., None, None])
    s = image_size[0] / meta['scale'][..., 0]
    ax = xy[..., 0] * s[..., None] + (image_size[0] / 2.0 - s * meta['center'][..., 0])[..., None]
    ay = xy[..., 1] * s[..., None] + (image_size[1] / 2.0 - s * meta['center'][..., 1])[..., None]
    sgx = ax * w_hm / image_size[0] / (w_hm - 1) * 2.0 - 1.0
    sgy = ay * h_hm / image_size[1] / (h_hm - 1) * 2.0 - 1.0
    sg = jnp.clip(jnp.stack([sgx, sgy], axis=2), -1.1, 1.1)
    feats = jnp.stack(feature_maps, axis=1).reshape(B, n, C, h_hm * w_hm)
    cubes_ref = _reference_fuse(sg, bnd[:, :, None, :], feats, w_hm, h_hm)
    np.testing.assert_allclose(np.asarray(cubes.reshape(B, C, NB)),
                               np.asarray(cubes_ref), rtol=2e-2, atol=2e-2)

    print("KERNEL_OK")
</pallas_src>

<mosaic_0001>
module attributes {stable_mosaic.version = 11 : i64} {
  func.func @_voxel_project_kernel(%arg0: i32, %arg1: i32, %arg2: i32, %arg3: memref<1x1x2x512xf32, #tpu.memory_space<vmem>>, %arg4: memref<1x1x1x512xf32, #tpu.memory_space<vmem>>, %arg5: memref<1x1x512xf32, #tpu.memory_space<vmem>>, %arg6: memref<1x1x1x4x256xf32, #tpu.memory_space<vmem>>, %arg7: memref<1x4x512xf32, #tpu.memory_space<vmem>>) attributes {dimension_semantics = [#tpu.dimension_semantics<parallel>, #tpu.dimension_semantics<parallel>, #tpu.dimension_semantics<arbitrary>], iteration_bounds = array<i64: 2, 1, 3>, scalar_prefetch = 0 : i64, scratch_operands = 0 : i64, tpu.core_type = #tpu.core_type<tc>, window_params = [{transform_indices = @transform_0, window_bounds = array<i64: 1, 1, 2, 512>}, {transform_indices = @transform_1, window_bounds = array<i64: 1, 1, 1, 512>}, {transform_indices = @transform_2, window_bounds = array<i64: 1, 1, 512>}, {transform_indices = @transform_3, window_bounds = array<i64: 1, 1, 1, 4, 256>}, {transform_indices = @transform_4, window_bounds = array<i64: 1, 4, 512>}]} {
    %c0 = arith.constant 0 : index
    %c0_0 = arith.constant 0 : index
    %c0_1 = arith.constant 0 : index
    %c0_2 = arith.constant 0 : index
    %0 = vector.load %arg3[%c0, %c0_0, %c0_1, %c0_2] : memref<1x1x2x512xf32, #tpu.memory_space<vmem>>, vector<1x1x1x512xf32>
    %1 = vector.shape_cast %0 : vector<1x1x1x512xf32> to vector<1x512xf32>
    %c0_3 = arith.constant 0 : index
    %c0_4 = arith.constant 0 : index
    %c1 = arith.constant 1 : index
    %c0_5 = arith.constant 0 : index
    %2 = vector.load %arg3[%c0_3, %c0_4, %c1, %c0_5] : memref<1x1x2x512xf32, #tpu.memory_space<vmem>>, vector<1x1x1x512xf32>
    %3 = vector.shape_cast %2 : vector<1x1x1x512xf32> to vector<1x512xf32>
    %cst = arith.constant 1.000000e+00 : f32
    %4 = vector.broadcast %cst : f32 to vector<1x512xf32>
    %5 = arith.addf %1, %4 : vector<1x512xf32>
    %cst_6 = arith.constant 7.500000e+00 : f32
    %6 = vector.broadcast %cst_6 : f32 to vector<1x512xf32>
    %7 = arith.mulf %5, %6 : vector<1x512xf32>
    %cst_7 = arith.constant 1.000000e+00 : f32
    %8 = vector.broadcast %cst_7 : f32 to vector<1x512xf32>
    %9 = arith.addf %3, %8 : vector<1x512xf32>
    %cst_8 = arith.constant 7.500000e+00 : f32
    %10 = vector.broadcast %cst_8 : f32 to vector<1x512xf32>
    %11 = arith.mulf %9, %10 : vector<1x512xf32>
    %12 = math.floor %7 : vector<1x512xf32>
    %13 = math.floor %11 : vector<1x512xf32>
    %14 = arith.subf %7, %12 : vector<1x512xf32>
    %cst_9 = arith.constant 1.000000e+00 : f32
    %15 = vector.broadcast %cst_9 : f32 to vector<1x512xf32>
    %16 = arith.subf %15, %14 : vector<1x512xf32>
    %17 = arith.subf %11, %13 : vector<1x512xf32>
    %cst_10 = arith.constant 1.000000e+00 : f32
    %18 = vector.broadcast %cst_10 : f32 to vector<1x512xf32>
    %19 = arith.subf %18, %17 : vector<1x512xf32>
    %20 = arith.fptosi %12 : vector<1x512xf32> to vector<1x512xi32>
    %21 = arith.fptosi %13 : vector<1x512xf32> to vector<1x512xi32>
    %c1_i32 = arith.constant 1 : i32
    %22 = vector.broadcast %c1_i32 : i32 to vector<1x512xi32>
    %23 = arith.addi %20, %22 : vector<1x512xi32>
    %c1_i32_11 = arith.constant 1 : i32
    %24 = vector.broadcast %c1_i32_11 : i32 to vector<1x512xi32>
    %25 = arith.addi %21, %24 : vector<1x512xi32>
    %c0_12 = arith.constant 0 : index
    %c0_13 = arith.constant 0 : index
    %c0_14 = arith.constant 0 : index
    %c0_15 = arith.constant 0 : index
    %26 = vector.load %arg4[%c0_12, %c0_13, %c0_14, %c0_15] : memref<1x1x1x512xf32, #tpu.memory_space<vmem>>, vector<1x1x1x512xf32>
    %27 = vector.shape_cast %26 : vector<1x1x1x512xf32> to vector<1x512xf32>
    %28 = arith.mulf %19, %16 : vector<1x512xf32>
    %c0_i32 = arith.constant 0 : i32
    %29 = vector.broadcast %c0_i32 : i32 to vector<1x512xi32>
    %30 = arith.cmpi sge, %20, %29 : vector<1x512xi32>
    %c16_i32 = arith.constant 16 : i32
    %31 = vector.broadcast %c16_i32 : i32 to vector<1x512xi32>
    %32 = arith.cmpi slt, %20, %31 : vector<1x512xi32>
    %33 = arith.andi %30, %32 : vector<1x512xi1>
    %c0_i32_16 = arith.constant 0 : i32
    %34 = vector.broadcast %c0_i32_16 : i32 to vector<1x512xi32>
    %35 = arith.cmpi sge, %21, %34 : vector<1x512xi32>
    %36 = arith.andi %33, %35 : vector<1x512xi1>
    %c16_i32_17 = arith.constant 16 : i32
    %37 = vector.broadcast %c16_i32_17 : i32 to vector<1x512xi32>
    %38 = arith.cmpi slt, %21, %37 : vector<1x512xi32>
    %39 = arith.andi %36, %38 : vector<1x512xi1>
    %40 = arith.mulf %28, %27 : vector<1x512xf32>
    %cst_18 = arith.constant 0.000000e+00 : f32
    %41 = vector.broadcast %cst_18 : f32 to vector<1x512xf32>
    %42 = arith.select %39, %40, %41 : vector<1x512xi1>, vector<1x512xf32>
    %c16_i32_19 = arith.constant 16 : i32
    %43 = vector.broadcast %c16_i32_19 : i32 to vector<1x512xi32>
    %44 = arith.muli %21, %43 : vector<1x512xi32>
    %45 = arith.addi %44, %20 : vector<1x512xi32>
    %46 = arith.mulf %19, %14 : vector<1x512xf32>
    %c0_i32_20 = arith.constant 0 : i32
    %47 = vector.broadcast %c0_i32_20 : i32 to vector<1x512xi32>
    %48 = arith.cmpi sge, %23, %47 : vector<1x512xi32>
    %c16_i32_21 = arith.constant 16 : i32
    %49 = vector.broadcast %c16_i32_21 : i32 to vector<1x512xi32>
    %50 = arith.cmpi slt, %23, %49 : vector<1x512xi32>
    %51 = arith.andi %48, %50 : vector<1x512xi1>
    %c0_i32_22 = arith.constant 0 : i32
    %52 = vector.broadcast %c0_i32_22 : i32 to vector<1x512xi32>
    %53 = arith.cmpi sge, %21, %52 : vector<1x512xi32>
    %54 = arith.andi %51, %53 : vector<1x512xi1>
    %c16_i32_23 = arith.constant 16 : i32
    %55 = vector.broadcast %c16_i32_23 : i32 to vector<1x512xi32>
    %56 = arith.cmpi slt, %21, %55 : vector<1x512xi32>
    %57 = arith.andi %54, %56 : vector<1x512xi1>
    %58 = arith.mulf %46, %27 : vector<1x512xf32>
    %cst_24 = arith.constant 0.000000e+00 : f32
    %59 = vector.broadcast %cst_24 : f32 to vector<1x512xf32>
    %60 = arith.select %57, %58, %59 : vector<1x512xi1>, vector<1x512xf32>
    %c16_i32_25 = arith.constant 16 : i32
    %61 = vector.broadcast %c16_i32_25 : i32 to vector<1x512xi32>
    %62 = arith.muli %21, %61 : vector<1x512xi32>
    %63 = arith.addi %62, %23 : vector<1x512xi32>
    %64 = arith.mulf %17, %16 : vector<1x512xf32>
    %c0_i32_26 = arith.constant 0 : i32
    %65 = vector.broadcast %c0_i32_26 : i32 to vector<1x512xi32>
    %66 = arith.cmpi sge, %20, %65 : vector<1x512xi32>
    %c16_i32_27 = arith.constant 16 : i32
    %67 = vector.broadcast %c16_i32_27 : i32 to vector<1x512xi32>
    %68 = arith.cmpi slt, %20, %67 : vector<1x512xi32>
    %69 = arith.andi %66, %68 : vector<1x512xi1>
    %c0_i32_28 = arith.constant 0 : i32
    %70 = vector.broadcast %c0_i32_28 : i32 to vector<1x512xi32>
    %71 = arith.cmpi sge, %25, %70 : vector<1x512xi32>
    %72 = arith.andi %69, %71 : vector<1x512xi1>
    %c16_i32_29 = arith.constant 16 : i32
    %73 = vector.broadcast %c16_i32_29 : i32 to vector<1x512xi32>
    %74 = arith.cmpi slt, %25, %73 : vector<1x512xi32>
    %75 = arith.andi %72, %74 : vector<1x512xi1>
    %76 = arith.mulf %64, %27 : vector<1x512xf32>
    %cst_30 = arith.constant 0.000000e+00 : f32
    %77 = vector.broadcast %cst_30 : f32 to vector<1x512xf32>
    %78 = arith.select %75, %76, %77 : vector<1x512xi1>, vector<1x512xf32>
    %c16_i32_31 = arith.constant 16 : i32
    %79 = vector.broadcast %c16_i32_31 : i32 to vector<1x512xi32>
    %80 = arith.muli %25, %79 : vector<1x512xi32>
    %81 = arith.addi %80, %20 : vector<1x512xi32>
    %82 = arith.mulf %17, %14 : vector<1x512xf32>
    %c0_i32_32 = arith.constant 0 : i32
    %83 = vector.broadcast %c0_i32_32 : i32 to vector<1x512xi32>
    %84 = arith.cmpi sge, %23, %83 : vector<1x512xi32>
    %c16_i32_33 = arith.constant 16 : i32
    %85 = vector.broadcast %c16_i32_33 : i32 to vector<1x512xi32>
    %86 = arith.cmpi slt, %23, %85 : vector<1x512xi32>
    %87 = arith.andi %84, %86 : vector<1x512xi1>
    %c0_i32_34 = arith.constant 0 : i32
    %88 = vector.broadcast %c0_i32_34 : i32 to vector<1x512xi32>
    %89 = arith.cmpi sge, %25, %88 : vector<1x512xi32>
    %90 = arith.andi %87, %89 : vector<1x512xi1>
    %c16_i32_35 = arith.constant 16 : i32
    %91 = vector.broadcast %c16_i32_35 : i32 to vector<1x512xi32>
    %92 = arith.cmpi slt, %25, %91 : vector<1x512xi32>
    %93 = arith.andi %90, %92 : vector<1x512xi1>
    %94 = arith.mulf %82, %27 : vector<1x512xf32>
    %cst_36 = arith.constant 0.000000e+00 : f32
    %95 = vector.broadcast %cst_36 : f32 to vector<1x512xf32>
    %96 = arith.select %93, %94, %95 : vector<1x512xi1>, vector<1x512xf32>
    %c16_i32_37 = arith.constant 16 : i32
    %97 = vector.broadcast %c16_i32_37 : i32 to vector<1x512xi32>
    %98 = arith.muli %25, %97 : vector<1x512xi32>
    %99 = arith.addi %98, %23 : vector<1x512xi32>
    %100 = tpu.iota {dimensions = array<i32: 0>} : vector<256x512xi32>
    %cst_38 = arith.constant 0.000000e+00 : f32
    %101 = vector.broadcast %cst_38 : f32 to vector<4x512xf32>
    %cst_39 = arith.constant 0.000000e+00 : f32
    %c0_i32_40 = arith.constant 0 : i32
    %c256_i32 = arith.constant 256 : i32
    %102 = arith.muli %c0_i32_40, %c256_i32 : i32
    %103 = vector.broadcast %102 : i32 to vector<1x512xi32>
    %104 = arith.subi %45, %103 : vector<1x512xi32>
    %105 = vector.broadcast %104 : vector<1x512xi32> to vector<256x512xi32>
    %106 = arith.cmpi eq, %100, %105 : vector<256x512xi32>
    %107 = vector.shape_cast %42 : vector<1x512xf32> to vector<1x512xf32>
    %108 = vector.broadcast %107 : vector<1x512xf32> to vector<256x512xf32>
    %109 = vector.broadcast %cst_39 : f32 to vector<256x512xf32>
    %110 = arith.select %106, %108, %109 : vector<256x512xi1>, vector<256x512xf32>
    %111 = vector.broadcast %102 : i32 to vector<1x512xi32>
    %112 = arith.subi %63, %111 : vector<1x512xi32>
    %113 = vector.broadcast %112 : vector<1x512xi32> to vector<256x512xi32>
    %114 = arith.cmpi eq, %100, %113 : vector<256x512xi32>
    %115 = vector.shape_cast %60 : vector<1x512xf32> to vector<1x512xf32>
    %116 = vector.broadcast %115 : vector<1x512xf32> to vector<256x512xf32>
    %117 = vector.broadcast %cst_39 : f32 to vector<256x512xf32>
    %118 = arith.select %114, %116, %117 : vector<256x512xi1>, vector<256x512xf32>
    %119 = arith.addf %110, %118 : vector<256x512xf32>
    %120 = vector.broadcast %102 : i32 to vector<1x512xi32>
    %121 = arith.subi %81, %120 : vector<1x512xi32>
    %122 = vector.broadcast %121 : vector<1x512xi32> to vector<256x512xi32>
    %123 = arith.cmpi eq, %100, %122 : vector<256x512xi32>
    %124 = vector.shape_cast %78 : vector<1x512xf32> to vector<1x512xf32>
    %125 = vector.broadcast %124 : vector<1x512xf32> to vector<256x512xf32>
    %126 = vector.broadcast %cst_39 : f32 to vector<256x512xf32>
    %127 = arith.select %123, %125, %126 : vector<256x512xi1>, vector<256x512xf32>
    %128 = arith.addf %119, %127 : vector<256x512xf32>
    %129 = vector.broadcast %102 : i32 to vector<1x512xi32>
    %130 = arith.subi %99, %129 : vector<1x512xi32>
    %131 = vector.broadcast %130 : vector<1x512xi32> to vector<256x512xi32>
    %132 = arith.cmpi eq, %100, %131 : vector<256x512xi32>
    %133 = vector.shape_cast %96 : vector<1x512xf32> to vector<1x512xf32>
    %134 = vector.broadcast %133 : vector<1x512xf32> to vector<256x512xf32>
    %135 = vector.broadcast %cst_39 : f32 to vector<256x512xf32>
    %136 = arith.select %132, %134, %135 : vector<256x512xi1>, vector<256x512xf32>
    %137 = arith.addf %128, %136 : vector<256x512xf32>
    %c0_41 = arith.constant 0 : index
    %c0_42 = arith.constant 0 : index
    %138 = arith.index_cast %c0_i32_40 : i32 to index
    %c0_43 = arith.constant 0 : index
    %c0_44 = arith.constant 0 : index
    %139 = vector.load %arg6[%c0_41, %c0_42, %138, %c0_43, %c0_44] : memref<1x1x1x4x256xf32, #tpu.memory_space<vmem>>, vector<1x1x1x4x256xf32>
    %140 = vector.shape_cast %139 : vector<1x1x1x4x256xf32> to vector<4x256xf32>
    %cst_45 = arith.constant dense<0.000000e+00> : vector<4x512xf32>
    %141 = tpu.matmul %140, %137, %cst_45 {dimension_numbers = #tpu.dot_dimension_numbers<[1], [0], [0], [1], [0, 0, 1, 1], [], []>} : vector<4x256xf32>, vector<256x512xf32>, vector<4x512xf32> -> vector<4x512xf32>
    %142 = arith.addf %101, %141 : vector<4x512xf32>
    %c1_i32_46 = arith.constant 1 : i32
    %c0_i32_47 = arith.constant 0 : i32
    %143 = arith.cmpi eq, %arg2, %c0_i32_47 : i32
    %144 = arith.extui %143 : i1 to i32
    %c0_i32_48 = arith.constant 0 : i32
    %145 = arith.cmpi ne, %144, %c0_i32_48 : i32
    scf.if %145 {
      %c0_52 = arith.constant 0 : index
      %c0_53 = arith.constant 0 : index
      %c0_54 = arith.constant 0 : index
      %152 = vector.load %arg7[%c0_52, %c0_53, %c0_54] : memref<1x4x512xf32, #tpu.memory_space<vmem>>, vector<1x4x512xf32>
      %153 = vector.shape_cast %152 : vector<1x4x512xf32> to vector<4x512xf32>
      %154 = vector.shape_cast %142 : vector<4x512xf32> to vector<1x4x512xf32>
      tpu.vector_store %arg7[%c0_52, %c0_53, %c0_54], %154 {strides = array<i32>} : memref<1x4x512xf32, #tpu.memory_space<vmem>>, vector<1x4x512xf32>,
    } else {
    }
    %c0_i32_49 = arith.constant 0 : i32
    %146 = arith.cmpi sgt, %arg2, %c0_i32_49 : i32
    %147 = arith.extui %146 : i1 to i32
    %c0_i32_50 = arith.constant 0 : i32
    %148 = arith.cmpi ne, %147, %c0_i32_50 : i32
    scf.if %148 {
      %c0_52 = arith.constant 0 : index
      %c0_53 = arith.constant 0 : index
      %c0_54 = arith.constant 0 : index
      %152 = vector.load %arg7[%c0_52, %c0_53, %c0_54] : memref<1x4x512xf32, #tpu.memory_space<vmem>>, vector<1x4x512xf32>
      %153 = vector.shape_cast %152 : vector<1x4x512xf32> to vector<4x512xf32>
      %154 = arith.addf %153, %142 : vector<4x512xf32>
      %c0_55 = arith.constant 0 : index
      %c0_56 = arith.constant 0 : index
      %c0_57 = arith.constant 0 : index
      %155 = vector.load %arg7[%c0_55, %c0_56, %c0_57] : memref<1x4x512xf32, #tpu.memory_space<vmem>>, vector<1x4x512xf32>
      %156 = vector.shape_cast %155 : vector<1x4x512xf32> to vector<4x512xf32>
      %157 = vector.shape_cast %154 : vector<4x512xf32> to vector<1x4x512xf32>
      tpu.vector_store %arg7[%c0_55, %c0_56, %c0_57], %157 {strides = array<i32>} : memref<1x4x512xf32, #tpu.memory_space<vmem>>, vector<1x4x512xf32>,
    } else {
    }
    %c2_i32 = arith.constant 2 : i32
    %149 = arith.cmpi eq, %arg2, %c2_i32 : i32
    %150 = arith.extui %149 : i1 to i32
    %c0_i32_51 = arith.constant 0 : i32
    %151 = arith.cmpi ne, %150, %c0_i32_51 : i32
    scf.if %151 {
      %c0_52 = arith.constant 0 : index
      %c0_53 = arith.constant 0 : index
      %c0_54 = arith.constant 0 : index
      %152 = vector.load %arg7[%c0_52, %c0_53, %c0_54] : memref<1x4x512xf32, #tpu.memory_space<vmem>>, vector<1x4x512xf32>
      %153 = vector.shape_cast %152 : vector<1x4x512xf32> to vector<4x512xf32>
      %c0_55 = arith.constant 0 : index
      %c0_56 = arith.constant 0 : index
      %c0_57 = arith.constant 0 : index
      %154 = vector.load %arg5[%c0_55, %c0_56, %c0_57] : memref<1x1x512xf32, #tpu.memory_space<vmem>>, vector<1x1x512xf32>
      %155 = vector.shape_cast %154 : vector<1x1x512xf32> to vector<1x512xf32>
      %156 = vector.broadcast %155 : vector<1x512xf32> to vector<4x512xf32>
      %157 = arith.mulf %153, %156 : vector<4x512xf32>
      %158 = arith.cmpf one, %157, %157 : vector<4x512xf32>
      %cst_58 = arith.constant 0.000000e+00 : f32
      %159 = vector.broadcast %cst_58 : f32 to vector<4x512xf32>
      %160 = arith.select %158, %159, %157 : vector<4x512xi1>, vector<4x512xf32>
      %cst_59 = arith.constant 0.000000e+00 : f32
      %cst_60 = arith.constant 1.000000e+00 : f32
      %161 = vector.broadcast %cst_59 : f32 to vector<4x512xf32>
      %162 = arith.maximumf %161, %160 : vector<4x512xf32>
      %163 = vector.broadcast %cst_60 : f32 to vector<4x512xf32>
      %164 = arith.minimumf %163, %162 : vector<4x512xf32>
      %c0_61 = arith.constant 0 : index
      %c0_62 = arith.constant 0 : index
      %c0_63 = arith.constant 0 : index
      %165 = vector.load %arg7[%c0_61, %c0_62, %c0_63] : memref<1x4x512xf32, #tpu.memory_space<vmem>>, vector<1x4x512xf32>
      %166 = vector.shape_cast %165 : vector<1x4x512xf32> to vector<4x512xf32>
      %167 = vector.shape_cast %164 : vector<4x512xf32> to vector<1x4x512xf32>
      tpu.vector_store %arg7[%c0_61, %c0_62, %c0_63], %167 {strides = array<i32>} : memref<1x4x512xf32, #tpu.memory_space<vmem>>, vector<1x4x512xf32>,
    } else {
    }
    return
  }
  func.func @transform_0(%arg0: i32, %arg1: i32, %arg2: i32) -> (i32, i32, i32, i32) {
    %c0_i32 = arith.constant 0 : i32
    %c0_i32_0 = arith.constant 0 : i32
    return %arg0, %arg2, %c0_i32, %arg1 : i32, i32, i32, i32
  }
  func.func @transform_1(%arg0: i32, %arg1: i32, %arg2: i32) -> (i32, i32, i32, i32) {
    %c0_i32 = arith.constant 0 : i32
    %c0_i32_0 = arith.constant 0 : i32
    return %arg0, %arg2, %c0_i32, %arg1 : i32, i32, i32, i32
  }
  func.func @transform_2(%arg0: i32, %arg1: i32, %arg2: i32) -> (i32, i32, i32) {
    %c0_i32 = arith.constant 0 : i32
    %c0_i32_0 = arith.constant 0 : i32
    return %arg0, %c0_i32, %arg1 : i32, i32, i32
  }
  func.func @transform_3(%arg0: i32, %arg1: i32, %arg2: i32) -> (i32, i32, i32, i32, i32) {
    %c0_i32 = arith.constant 0 : i32
    %c0_i32_0 = arith.constant 0 : i32
    %c0_i32_1 = arith.constant 0 : i32
    %c0_i32_2 = arith.constant 0 : i32
    return %arg0, %arg2, %c0_i32, %c0_i32_0, %c0_i32_1 : i32, i32, i32, i32, i32
  }
  func.func @transform_4(%arg0: i32, %arg1: i32, %arg2: i32) -> (i32, i32, i32) {
    %c0_i32 = arith.constant 0 : i32
    %c0_i32_0 = arith.constant 0 : i32
    return %arg0, %c0_i32, %arg1 : i32, i32, i32
  }
}

</mosaic_0001>

<llo_original>
// kernel: tpu_custom_call.1
$region0: #{tpu_custom_call.1}
  #allocation0 [shape = 'u32[]', space=smem, size = 0x4, offset = 0x4, fixed_abs, tag = 'smem constant byte address 0x4 - core index']
  #allocation1 [shape = 'u32[144,128]{1,0:T(1,128)}', space=vmem, size = 0x12000, scoped, tag = 'internal scratch']
  %s0 = inlined_call_operand.hbm [shape: f32[2,3,2,512], index: 0, kind: input, shape index: {}]
  %s1 = inlined_call_operand.hbm [shape: f32[2,3,1,512], index: 1, kind: input, shape index: {}]
  %s2 = inlined_call_operand.hbm [shape: f32[2,1,512], index: 2, kind: input, shape index: {}]
  %s3 = inlined_call_operand.hbm [shape: f32[2,3,1,4,256], index: 3, kind: input, shape index: {}]
  %s4 = inlined_call_operand.hbm [shape: f32[2,4,512], index: 4, kind: output, shape index: {}]
  %s5 = sld [smem:[#allocation0]]
  $region77: #{tpu_custom_call.1} parent=0
    _
  %s7 = ssub.s32 1, %s5
  %s8 = scalar_select 0, %s7, %s5
  $region1: #{tpu_custom_call.1} parent=0
    #allocation2 [shape = 'u8[8192]{0}', space=vmem, size = 0x2000, scoped, tag = 'input window, operand 0']
    #allocation3 [shape = 's32[2]{0}', space=sflag, size = 0x8, scoped, tag = 'scoped memory for tpu_custom_call.1']
    #allocation4 [shape = 's32[2]{0}', space=sflag, size = 0x8, scoped, tag = 'scoped memory for tpu_custom_call.1']
    #allocation5 [shape = 'u8[4096]{0}', space=vmem, size = 0x1000, scoped, tag = 'input window, operand 1']
    #allocation6 [shape = 's32[2]{0}', space=sflag, size = 0x8, scoped, tag = 'scoped memory for tpu_custom_call.1']
    #allocation7 [shape = 'u8[4096]{0}', space=vmem, size = 0x1000, scoped, tag = 'input window, operand 2']
    #allocation8 [shape = 'u8[8192]{0}', space=vmem, size = 0x2000, scoped, tag = 'input window, operand 3']
    #allocation9 [shape = 's32[2]{0}', space=sflag, size = 0x8, scoped, tag = 'scoped memory for tpu_custom_call.1']
    #allocation10 [shape = 'u8[16384]{0}', space=vmem, size = 0x4000, scoped, tag = 'output window, operand 0']
    %9 = vsyncpa [#allocation3], 0
    %s10 = scalar_lea.sflag [#allocation3], 1
    %11 = vsyncpa %s10, 0
    %12 = vsyncpa [#allocation6], 0
    %s13 = scalar_lea.sflag [#allocation6], 1
    %14 = vsyncpa %s13, 0
    %15 = vsyncpa [#allocation9], 0
    %s16 = scalar_lea.sflag [#allocation9], 1
    %17 = vsyncpa %s16, 0
    %18 = vsyncpa [#allocation4], 0
    %s19 = scalar_lea.sflag [#allocation4], 1
    %20 = vsyncpa %s19, 0
    loop: start=0, step=1, limit=8
    $region2: #{tpu_custom_call.1} parent=1 // loop_pre_header
      _
    $region3: #{tpu_custom_call.1} parent=1 // loop_header
      %s22 = sphi 0, %s26
      %p23 = scmp.ge.s32.totalorder %s22, 8
      %s29 = sphi 0, %s48
      %s30 = sphi 0, %s44
      %s31 = sphi 0, %s40
      %s32 = sphi 0, %s29
      %s33 = sphi 0, %s30
      %s34 = sphi 0, %s31
      %s35 = sphi 0, %s32
      %s36 = sphi 0, %s33
      %s37 = sphi 0, %s34
      %s55 = sphi 0, %s57
      %s58 = sphi 0, %s55
      %s59 = sphi 0, %s58
      %s75 = sphi 0, %s59
      %s85 = sphi 0, %s87
      %s88 = sphi 0, %s85
      %s89 = sphi 0, %s88
      %s105 = sphi 0, %s89
      %s113 = sphi 0, %s115
      %s116 = sphi 0, %s113
      %s117 = sphi 0, %s116
      %s133 = sphi 0, %s117
      %s141 = sphi 0, %s143
      %s144 = sphi 0, %s141
      %s145 = sphi 0, %s144
      %s161 = sphi 0, %s145
      %s169 = sphi 0, %s171
      %s172 = sphi 0, %s169
      %s173 = sphi 0, %s172
      %s189 = sphi 0, %s173
    $region4: #{tpu_custom_call.1} parent=1 // loop_header_branch
      %25 = sbr.rel (%p23) target = $region8
    $region5: #{tpu_custom_call.1} parent=1 // loop_body
      %s27 = ssub.s32 %s22, 1
      %s28 = ssub.s32 %s22, 2
      %s38 = sadd.s32 1, %s31
      %p39 = scmp.ge.s32.totalorder %s38, 3
      %s40 = scalar_select %p39, 0, %s38
      %s41 = sadd.s32 1, %s30
      %s42 = scalar_select %p39, %s41, %s30
      %p43 = scmp.ge.s32.totalorder %s42, 1
      %s44 = scalar_select %p43, 0, %s42
      %s45 = sadd.s32 1, %s29
      %s46 = scalar_select %p43, %s45, %s29
      %p47 = scmp.ge.s32.totalorder %s46, 2
      %s48 = scalar_select %p47, 0, %s46
      %s49 = ssub.s32 %s29, %s48
      %s50 = ssub.s32 %s31, %s40
      %s51 = sor.u32 %s49, %s50
      %s52 = ssub.s32 %s30, %s44
      %s53 = sor.u32 %s51, %s52
      %p54 = scmp.eq.s32.totalorder %s53, 0
      %s56 = sadd.s32 %s55, 1
      %s57 = scalar_select %p54, %s55, %s56
      %p60 = pneg %p54
      %p61 = scmp.eq.s32.totalorder %s22, 5
      %p62 = por %p60, %p61
      %p63 = scmp.ne.s32.totalorder %s55, %s58
      %p64 = scmp.eq.s32.totalorder %s22, 0
      %p65 = por %p63, %p64
      %p66 = scmp.ne.s32.totalorder %s55, %s58
      %p67 = scmp.eq.s32.totalorder %s27, 5
      %p68 = por %p66, %p67
      %p69 = scmp.ne.s32.totalorder %s58, %s59
      %p70 = scmp.eq.s32.totalorder %s27, 0
      %p71 = por %p69, %p70
      %p72 = scmp.ne.s32.totalorder %s58, %s59
      %p73 = scmp.eq.s32.totalorder %s28, 5
      %p74 = por %p72, %p73
      %p76 = scmp.ne.s32.totalorder %s59, %s75
      %p77 = scmp.eq.s32.totalorder %s28, 0
      %p78 = por %p76, %p77
      %s79 = ssub.s32 %s29, %s48
      %s80 = ssub.s32 %s31, %s40
      %s81 = sor.u32 %s79, %s80
      %s82 = ssub.s32 %s30, %s44
      %s83 = sor.u32 %s81, %s82
      %p84 = scmp.eq.s32.totalorder %s83, 0
      %s86 = sadd.s32 %s85, 1
      %s87 = scalar_select %p84, %s85, %s86
      %p90 = pneg %p84
      %p91 = scmp.eq.s32.totalorder %s22, 5
      %p92 = por %p90, %p91
      %p93 = scmp.ne.s32.totalorder %s85, %s88
      %p94 = scmp.eq.s32.totalorder %s22, 0
      %p95 = por %p93, %p94
      %p96 = scmp.ne.s32.totalorder %s85, %s88
      %p97 = scmp.eq.s32.totalorder %s27, 5
      %p98 = por %p96, %p97
      %p99 = scmp.ne.s32.totalorder %s88, %s89
      %p100 = scmp.eq.s32.totalorder %s27, 0
      %p101 = por %p99, %p100
      %p102 = scmp.ne.s32.totalorder %s88, %s89
      %p103 = scmp.eq.s32.totalorder %s28, 5
      %p104 = por %p102, %p103
      %p106 = scmp.ne.s32.totalorder %s89, %s105
      %p107 = scmp.eq.s32.totalorder %s28, 0
      %p108 = por %p106, %p107
      %s109 = ssub.s32 %s29, %s48
      %s110 = ssub.s32 %s30, %s44
      %s111 = sor.u32 %s109, %s110
      %p112 = scmp.eq.s32.totalorder %s111, 0
      %s114 = sadd.s32 %s113, 1
      %s115 = scalar_select %p112, %s113, %s114
      %p118 = pneg %p112
      %p119 = scmp.eq.s32.totalorder %s22, 5
      %p120 = por %p118, %p119
      %p121 = scmp.ne.s32.totalorder %s113, %s116
      %p122 = scmp.eq.s32.totalorder %s22, 0
      %p123 = por %p121, %p122
      %p124 = scmp.ne.s32.totalorder %s113, %s116
      %p125 = scmp.eq.s32.totalorder %s27, 5
      %p126 = por %p124, %p125
      %p127 = scmp.ne.s32.totalorder %s116, %s117
      %p128 = scmp.eq.s32.totalorder %s27, 0
      %p129 = por %p127, %p128
      %p130 = scmp.ne.s32.totalorder %s116, %s117
      %p131 = scmp.eq.s32.totalorder %s28, 5
      %p132 = por %p130, %p131
      %p134 = scmp.ne.s32.totalorder %s117, %s133
      %p135 = scmp.eq.s32.totalorder %s28, 0
      %p136 = por %p134, %p135
      %s137 = ssub.s32 %s29, %s48
      %s138 = ssub.s32 %s31, %s40
      %s139 = sor.u32 %s137, %s138
      %p140 = scmp.eq.s32.totalorder %s139, 0
      %s142 = sadd.s32 %s141, 1
      %s143 = scalar_select %p140, %s141, %s142
      %p146 = pneg %p140
      %p147 = scmp.eq.s32.totalorder %s22, 5
      %p148 = por %p146, %p147
      %p149 = scmp.ne.s32.totalorder %s141, %s144
      %p150 = scmp.eq.s32.totalorder %s22, 0
      %p151 = por %p149, %p150
      %p152 = scmp.ne.s32.totalorder %s141, %s144
      %p153 = scmp.eq.s32.totalorder %s27, 5
      %p154 = por %p152, %p153
      %p155 = scmp.ne.s32.totalorder %s144, %s145
      %p156 = scmp.eq.s32.totalorder %s27, 0
      %p157 = por %p155, %p156
      %p158 = scmp.ne.s32.totalorder %s144, %s145
      %p159 = scmp.eq.s32.totalorder %s28, 5
      %p160 = por %p158, %p159
      %p162 = scmp.ne.s32.totalorder %s145, %s161
      %p163 = scmp.eq.s32.totalorder %s28, 0
      %p164 = por %p162, %p163
      %s165 = ssub.s32 %s29, %s48
      %s166 = ssub.s32 %s30, %s44
      %s167 = sor.u32 %s165, %s166
      %p168 = scmp.eq.s32.totalorder %s167, 0
      %s170 = sadd.s32 %s169, 1
      %s171 = scalar_select %p168, %s169, %s170
      %p174 = pneg %p168
      %p175 = scmp.eq.s32.totalorder %s22, 5
      %p176 = por %p174, %p175
      %p177 = scmp.ne.s32.totalorder %s169, %s172
      %p178 = scmp.eq.s32.totalorder %s22, 0
      %p179 = por %p177, %p178
      %p180 = scmp.ne.s32.totalorder %s169, %s172
      %p181 = scmp.eq.s32.totalorder %s27, 5
      %p182 = por %p180, %p181
      %p183 = scmp.ne.s32.totalorder %s172, %s173
      %p184 = scmp.eq.s32.totalorder %s27, 0
      %p185 = por %p183, %p184
      %p186 = scmp.ne.s32.totalorder %s172, %s173
      %p187 = scmp.eq.s32.totalorder %s28, 5
      %p188 = por %p186, %p187
      %p190 = scmp.ne.s32.totalorder %s173, %s189
      %p191 = scmp.eq.s32.totalorder %s28, 0
      %p192 = por %p190, %p191
      %p193 = scmp.le.s32.totalorder 1, %s22
      %p194 = scmp.lt.s32.totalorder %s22, 7
      %p195 = pnand %p193, %p194
      %p196 = pneg %p195
      // Predicated region
      $region9: #{tpu_custom_call.1} parent=5 // pred_check
        _
      $region10: #{tpu_custom_call.1} parent=5 // pred_check_branch
        %198 = sbr.rel (%p195) target = $region12
      $region11: #{tpu_custom_call.1} parent=5 // pred_region
        %s199 = ssub.s32 %s22, 1
      $region12: #{tpu_custom_call.1} parent=5 // pred_fallthru
        _
      %p200 = scmp.lt.s32.totalorder %s22, 6
      // Predicated region
      $region13: #{tpu_custom_call.1} parent=5 // pred_check
        %p201 = pneg %p200
      $region14: #{tpu_custom_call.1} parent=5 // pred_check_branch
        %203 = sbr.rel (%p201) target = $region16
      $region15: #{tpu_custom_call.1} parent=5 // pred_region
        // Predicated region
        $region17: #{tpu_custom_call.1} parent=15 // pred_check
          %p204 = pneg %p65
        $region18: #{tpu_custom_call.1} parent=15 // pred_check_branch
          %206 = sbr.rel (%p204) target = $region20
        $region19: #{tpu_custom_call.1} parent=15 // pred_region
          %s207 = sand.u32 %s55, 1
          %s208 = scalar_lea.sflag [#allocation3], %s207
          %s209 = sand.u32 %s55, 1
          %s210 = smul.addr %s209, 8
          %s211 = scalar_lea.vmem [#allocation2], %s210
          %s212 = smul.u32 4, %s30
          %s214 = ssub.s32 128, 128
          %215 = vsyncadd %s208, %s214
          %s216 = smul.addr %s31, 4
          %s217 = sadd.s32 %s212, %s216
          %s218 = smul.addr %s29, 12
          %s219 = sadd.s32 %s217, %s218
          %s220 = smul.addr %s219, 32
          %s221 = scalar_lea.hbm %s0, %s220
          %s223 = sshll.u32 %s211, 4
          %s224 = int_to_ptr.vmem [resolvable:$true] %s223
          %226 = dma.hbm_to_vmem [thread:$0]  %s221, 128, %s224, %s208
        $region20: #{tpu_custom_call.1} parent=15 // pred_fallthru
          _
        // Predicated region
        $region21: #{tpu_custom_call.1} parent=15 // pred_check
          %p227 = pneg %p95
        $region22: #{tpu_custom_call.1} parent=15 // pred_check_branch
          %229 = sbr.rel (%p227) target = $region24
        $region23: #{tpu_custom_call.1} parent=15 // pred_region
          %s230 = sand.u32 %s22, 1
          %s231 = scalar_lea.sflag [#allocation6], %s230
          %s232 = sand.u32 %s85, 1
          %s233 = smul.addr %s232, 4
          %s234 = scalar_lea.vmem [#allocation5], %s233
          %s235 = smul.u32 4, %s30
          %s237 = ssub.s32 64, 64
          %238 = vsyncadd %s231, %s237
          %s239 = smul.addr %s31, 4
          %s240 = sadd.s32 %s235, %s239
          %s241 = smul.addr %s29, 12
          %s242 = sadd.s32 %s240, %s241
          %s243 = smul.addr %s242, 16
          %s244 = scalar_lea.hbm %s1, %s243
          %s246 = sshll.u32 %s234, 4
          %s247 = int_to_ptr.vmem [resolvable:$true] %s246
          %249 = dma.hbm_to_vmem [thread:$0]  %s244, 64, %s247, %s231
        $region24: #{tpu_custom_call.1} parent=15 // pred_fallthru
          _
        // Predicated region
        $region25: #{tpu_custom_call.1} parent=15 // pred_check
          %p250 = pneg %p123
        $region26: #{tpu_custom_call.1} parent=15 // pred_check_branch
          %252 = sbr.rel (%p250) target = $region28
        $region27: #{tpu_custom_call.1} parent=15 // pred_region
          %s253 = sand.u32 %s22, 1
          %s254 = scalar_lea.sflag [#allocation6], %s253
          %s255 = sand.u32 %s113, 1
          %s256 = smul.addr %s255, 4
          %s257 = scalar_lea.vmem [#allocation7], %s256
          %s258 = smul.u32 4, %s30
          %s260 = ssub.s32 64, 64
          %261 = vsyncadd %s254, %s260
          %s262 = smul.addr %s29, 4
          %s263 = sadd.s32 %s258, %s262
          %s264 = smul.addr %s263, 16
          %s265 = scalar_lea.hbm %s2, %s264
          %s267 = sshll.u32 %s257, 4
          %s268 = int_to_ptr.vmem [resolvable:$true] %s267
          %270 = dma.hbm_to_vmem [thread:$0]  %s265, 64, %s268, %s254
        $region28: #{tpu_custom_call.1} parent=15 // pred_fallthru
          _
        // Predicated region
        $region29: #{tpu_custom_call.1} parent=15 // pred_check
          %p271 = pneg %p151
        $region30: #{tpu_custom_call.1} parent=15 // pred_check_branch
          %273 = sbr.rel (%p271) target = $region32
        $region31: #{tpu_custom_call.1} parent=15 // pred_region
          %s274 = sand.u32 %s141, 1
          %s275 = scalar_lea.sflag [#allocation9], %s274
          %s276 = sand.u32 %s141, 1
          %s277 = smul.addr %s276, 8
          %s278 = scalar_lea.vmem [#allocation8], %s277
          %s280 = ssub.s32 128, 128
          %281 = vsyncadd %s275, %s280
          %s282 = smul.addr %s31, 2
          %s283 = smul.addr %s29, 6
          %s284 = sadd.s32 %s282, %s283
          %s285 = smul.addr %s284, 64
          %s286 = scalar_lea.hbm %s3, %s285
          %s288 = sshll.u32 %s278, 4
          %s289 = int_to_ptr.vmem [resolvable:$true] %s288
          %291 = dma.hbm_to_vmem [thread:$0]  %s286, 128, %s289, %s275
        $region32: #{tpu_custom_call.1} parent=15 // pred_fallthru
          _
      $region16: #{tpu_custom_call.1} parent=5 // pred_fallthru
        _
      %p292 = scmp.le.s32.totalorder 1, %s22
      %p293 = scmp.lt.s32.totalorder %s22, 7
      %p294 = pnand %p292, %p293
      %p295 = pneg %p294
      // Predicated region
      $region33: #{tpu_custom_call.1} parent=5 // pred_check
        _
      $region34: #{tpu_custom_call.1} parent=5 // pred_check_branch
        %297 = sbr.rel (%p294) target = $region36
      $region35: #{tpu_custom_call.1} parent=5 // pred_region
        %s298 = ssub.s32 %s22, 1
        %s299 = sand.u32 %s58, 1
        %s300 = scalar_lea.sflag [#allocation3], %s299
        %s301 = sand.u32 %s58, 1
        %s302 = smul.addr %s301, 8
        %s303 = scalar_lea.vmem [#allocation2], %s302
        // Predicated region
        $region37: #{tpu_custom_call.1} parent=35 // pred_check
          %p304 = pneg %p71
        $region38: #{tpu_custom_call.1} parent=35 // pred_check_branch
          %306 = sbr.rel (%p304) target = $region40
        $region39: #{tpu_custom_call.1} parent=35 // pred_region
          %307 = dma.done %s300, 128
        $region40: #{tpu_custom_call.1} parent=35 // pred_fallthru
          _
        %s308 = sand.u32 %s27, 1
        %s309 = scalar_lea.sflag [#allocation6], %s308
        %s310 = sand.u32 %s88, 1
        %s311 = smul.addr %s310, 4
        %s312 = scalar_lea.vmem [#allocation5], %s311
        // Predicated region
        $region41: #{tpu_custom_call.1} parent=35 // pred_check
          %p313 = pneg %p101
        $region42: #{tpu_custom_call.1} parent=35 // pred_check_branch
          %315 = sbr.rel (%p313) target = $region44
        $region43: #{tpu_custom_call.1} parent=35 // pred_region
          %316 = dma.done %s309, 64
        $region44: #{tpu_custom_call.1} parent=35 // pred_fallthru
          _
        %s317 = sand.u32 %s27, 1
        %s318 = scalar_lea.sflag [#allocation6], %s317
        %s319 = sand.u32 %s116, 1
        %s320 = smul.addr %s319, 4
        %s321 = scalar_lea.vmem [#allocation7], %s320
        // Predicated region
        $region45: #{tpu_custom_call.1} parent=35 // pred_check
          %p322 = pneg %p129
        $region46: #{tpu_custom_call.1} parent=35 // pred_check_branch
          %324 = sbr.rel (%p322) target = $region48
        $region47: #{tpu_custom_call.1} parent=35 // pred_region
          %325 = dma.done %s318, 64
        $region48: #{tpu_custom_call.1} parent=35 // pred_fallthru
          _
        %s326 = sand.u32 %s144, 1
        %s327 = scalar_lea.sflag [#allocation9], %s326
        %s328 = sand.u32 %s144, 1
        %s329 = smul.addr %s328, 8
        %s330 = scalar_lea.vmem [#allocation8], %s329
        // Predicated region
        $region49: #{tpu_custom_call.1} parent=35 // pred_check
          %p331 = pneg %p157
        $region50: #{tpu_custom_call.1} parent=35 // pred_check_branch
          %333 = sbr.rel (%p331) target = $region52
        $region51: #{tpu_custom_call.1} parent=35 // pred_region
          %334 = dma.done %s327, 128
        $region52: #{tpu_custom_call.1} parent=35 // pred_fallthru
          _
        %s335 = sand.u32 %s58, 1
        %s336 = scalar_lea.sflag [#allocation3], %s335
        %s337 = sand.u32 %s58, 1
        %s338 = smul.addr %s337, 8
        %s339 = scalar_lea.vmem [#allocation2], %s338
        %p340 = pneg %p71
        %p341 = pneg %p68
        %s342 = sand.u32 %s27, 1
        %s343 = scalar_lea.sflag [#allocation6], %s342
        %s344 = sand.u32 %s88, 1
        %s345 = smul.addr %s344, 4
        %s346 = scalar_lea.vmem [#allocation5], %s345
        %p347 = pneg %p101
        %p348 = pneg %p98
        %s349 = sand.u32 %s27, 1
        %s350 = scalar_lea.sflag [#allocation6], %s349
        %s351 = sand.u32 %s116, 1
        %s352 = smul.addr %s351, 4
        %s353 = scalar_lea.vmem [#allocation7], %s352
        %p354 = pneg %p129
        %p355 = pneg %p126
        %s356 = sand.u32 %s144, 1
        %s357 = scalar_lea.sflag [#allocation9], %s356
        %s358 = sand.u32 %s144, 1
        %s359 = smul.addr %s358, 8
        %s360 = scalar_lea.vmem [#allocation8], %s359
        %p361 = pneg %p157
        %p362 = pneg %p154
        %p363 = pneg %p185
        %p364 = pneg %p182
        %s365 = sand.u32 %s172, 1
        %s366 = scalar_lea.sflag [#allocation4], %s365
        %s367 = sand.u32 %s172, 1
        %s368 = smul.addr %s367, 16
        %s369 = scalar_lea.vmem [#allocation10], %s368
        %s370 = smul.u32 4, %s33
        %s371 = smul.u32 4, %s33
        %s372 = smul.u32 4, %s33
        %s373 = smul.u32 4, %s33
        %v374 = vld [vmem:[%s303] ss:$2 sm:$0xf]
        %s375 = scalar_lea.vmem %s303, 1 [#allocation2]
        %v376 = vld [vmem:[%s375] ss:$2 sm:$0xf]
        %v377 = vadd.f32 %v374, 1.0
        %v378 = vmul.f32 %v377, 7.5
        %v379 = vadd.f32 %v376, 1.0
        %v380 = vmul.f32 %v379, 7.5
        %v381 = vfloor.f32 %v378
        %v382 = vfloor.f32 %v380
        %v383 = vsub.f32 %v378, %v381
        %v384 = vsub.f32 1.0, %v383
        %v385 = vsub.f32 %v380, %v382
        %v386 = vsub.f32 1.0, %v385
        %v387 = vcvt.f32.s32.to.zero.pseudo %v381
        %v388 = vcvt.f32.s32.to.zero.pseudo %v382
        %v389 = vadd.s32 %v387, 1
        %v390 = vadd.s32 %v388, 1
        %v391 = vld [vmem:[%s312] sm:$0xf]
        %v392 = vmul.f32 %v386, %v384
        %vm393 = vcmp.ge.s32.totalorder %v387, 0
        %vm394 = vcmp.lt.s32.totalorder %v387, 16
        %vm395 = vmand %vm393, %vm394
        %vm396 = vcmp.ge.s32.totalorder %v388, 0
        %vm397 = vmand %vm395, %vm396
        %vm398 = vcmp.lt.s32.totalorder %v388, 16
        %vm399 = vmand %vm397, %vm398
        %v400 = vmul.f32 %v392, %v391
        %v401 = vsel %vm399, %v400, 0.0
        %v402 = vmul.u32 %v388, 16
        %v403 = vadd.s32 %v402, %v387
        %v404 = vmul.f32 %v386, %v383
        %vm405 = vcmp.ge.s32.totalorder %v389, 0
        %vm406 = vcmp.lt.s32.totalorder %v389, 16
        %vm407 = vmand %vm405, %vm406
        %vm408 = vmand %vm407, %vm396
        %vm409 = vmand %vm408, %vm398
        %v410 = vmul.f32 %v404, %v391
        %v411 = vsel %vm409, %v410, 0.0
        %v412 = vadd.s32 %v402, %v389
        %v413 = vmul.f32 %v385, %v384
        %vm414 = vcmp.ge.s32.totalorder %v390, 0
        %vm415 = vmand %vm395, %vm414
        %vm416 = vcmp.lt.s32.totalorder %v390, 16
        %vm417 = vmand %vm415, %vm416
        %v418 = vmul.f32 %v413, %v391
        %v419 = vsel %vm417, %v418, 0.0
        %v420 = vmul.u32 %v390, 16
        %v421 = vadd.s32 %v420, %v387
        %v422 = vmul.f32 %v385, %v383
        %vm423 = vmand %vm407, %vm414
        %vm424 = vmand %vm423, %vm416
        %v425 = vmul.f32 %v422, %v391
        %v426 = vsel %vm424, %v425, 0.0
        %v427 = vadd.s32 %v420, %v389
        %v428 = vlaneseq
        %v429 = vshrl.u32 %v428, 7
        %v430 = vadd.s32 %v429, 8
        %v431 = vadd.s32 %v429, 16
        %v432 = vadd.s32 %v429, 24
        %v433 = vadd.s32 %v429, 32
        %v434 = vadd.s32 %v429, 40
        %v435 = vadd.s32 %v429, 48
        %v436 = vadd.s32 %v429, 56
        %v437 = vadd.s32 %v429, 64
        %v438 = vadd.s32 %v429, 72
        %v439 = vadd.s32 %v429, 80
        %v440 = vadd.s32 %v429, 88
        %v441 = vadd.s32 %v429, 96
        %v442 = vadd.s32 %v429, 104
        %v443 = vadd.s32 %v429, 112
        %v444 = vadd.s32 %v429, 120
        %v445 = vadd.s32 %v429, 128
        %v446 = vadd.s32 %v429, 136
        %v447 = vadd.s32 %v429, 144
        %v448 = vadd.s32 %v429, 152
        %v449 = vadd.s32 %v429, 160
        %v450 = vadd.s32 %v429, 168
        %v451 = vadd.s32 %v429, 176
        %v452 = vadd.s32 %v429, 184
        %v453 = vadd.s32 %v429, 192
        %v454 = vadd.s32 %v429, 200
        %v455 = vadd.s32 %v429, 208
        %v456 = vadd.s32 %v429, 216
        %v457 = vadd.s32 %v429, 224
        %v458 = vadd.s32 %v429, 232
        %v459 = vadd.s32 %v429, 240
        %v460 = vadd.s32 %v429, 248
        %v461 = vlaneseq
        %v462 = vshrl.u32 %v461, 7
        %v463 = vsub.s32 0, %v462
        %v464 = vrot.slane %v403, %v463
        %v465 = vlaneseq
        %v466 = vshrl.u32 %v465, 7
        %v467 = vsub.s32 1, %v466
        %v468 = vrot.slane %v403, %v467
        %v469 = vlaneseq
        %v470 = vshrl.u32 %v469, 7
        %v471 = vsub.s32 2, %v470
        %v472 = vrot.slane %v403, %v471
        %v473 = vlaneseq
        %v474 = vshrl.u32 %v473, 7
        %v475 = vsub.s32 3, %v474
        %v476 = vrot.slane %v403, %v475
        %vm477 = vcmp.eq.s32.totalorder %v429, %v464
        %vm478 = vcmp.eq.s32.totalorder %v429, %v468
        %vm479 = vcmp.eq.s32.totalorder %v429, %v472
        %vm480 = vcmp.eq.s32.totalorder %v429, %v476
        %vm481 = vcmp.eq.s32.totalorder %v430, %v464
        %vm482 = vcmp.eq.s32.totalorder %v430, %v468
        %vm483 = vcmp.eq.s32.totalorder %v430, %v472
        %vm484 = vcmp.eq.s32.totalorder %v430, %v476
        %vm485 = vcmp.eq.s32.totalorder %v431, %v464
        %vm486 = vcmp.eq.s32.totalorder %v431, %v468
        %vm487 = vcmp.eq.s32.totalorder %v431, %v472
        %vm488 = vcmp.eq.s32.totalorder %v431, %v476
        %vm489 = vcmp.eq.s32.totalorder %v432, %v464
        %vm490 = vcmp.eq.s32.totalorder %v432, %v468
        %vm491 = vcmp.eq.s32.totalorder %v432, %v472
        %vm492 = vcmp.eq.s32.totalorder %v432, %v476
        %vm493 = vcmp.eq.s32.totalorder %v433, %v464
        %vm494 = vcmp.eq.s32.totalorder %v433, %v468
        %vm495 = vcmp.eq.s32.totalorder %v433, %v472
        %vm496 = vcmp.eq.s32.totalorder %v433, %v476
        %vm497 = vcmp.eq.s32.totalorder %v434, %v464
        %vm498 = vcmp.eq.s32.totalorder %v434, %v468
        %vm499 = vcmp.eq.s32.totalorder %v434, %v472
        %vm500 = vcmp.eq.s32.totalorder %v434, %v476
        %vm501 = vcmp.eq.s32.totalorder %v435, %v464
        %vm502 = vcmp.eq.s32.totalorder %v435, %v468
        %vm503 = vcmp.eq.s32.totalorder %v435, %v472
        %vm504 = vcmp.eq.s32.totalorder %v435, %v476
        %vm505 = vcmp.eq.s32.totalorder %v436, %v464
        %vm506 = vcmp.eq.s32.totalorder %v436, %v468
        %vm507 = vcmp.eq.s32.totalorder %v436, %v472
        %vm508 = vcmp.eq.s32.totalorder %v436, %v476
        %vm509 = vcmp.eq.s32.totalorder %v437, %v464
        %vm510 = vcmp.eq.s32.totalorder %v437, %v468
        %vm511 = vcmp.eq.s32.totalorder %v437, %v472
        %vm512 = vcmp.eq.s32.totalorder %v437, %v476
        %vm513 = vcmp.eq.s32.totalorder %v438, %v464
        %vm514 = vcmp.eq.s32.totalorder %v438, %v468
        %vm515 = vcmp.eq.s32.totalorder %v438, %v472
        %vm516 = vcmp.eq.s32.totalorder %v438, %v476
        %vm517 = vcmp.eq.s32.totalorder %v439, %v464
        %vm518 = vcmp.eq.s32.totalorder %v439, %v468
        %vm519 = vcmp.eq.s32.totalorder %v439, %v472
        %vm520 = vcmp.eq.s32.totalorder %v439, %v476
        %vm521 = vcmp.eq.s32.totalorder %v440, %v464
        %vm522 = vcmp.eq.s32.totalorder %v440, %v468
        %vm523 = vcmp.eq.s32.totalorder %v440, %v472
        %vm524 = vcmp.eq.s32.totalorder %v440, %v476
        %vm525 = vcmp.eq.s32.totalorder %v441, %v464
        %vm526 = vcmp.eq.s32.totalorder %v441, %v468
        %vm527 = vcmp.eq.s32.totalorder %v441, %v472
        %vm528 = vcmp.eq.s32.totalorder %v441, %v476
        %vm529 = vcmp.eq.s32.totalorder %v442, %v464
        %vm530 = vcmp.eq.s32.totalorder %v442, %v468
        %vm531 = vcmp.eq.s32.totalorder %v442, %v472
        %vm532 = vcmp.eq.s32.totalorder %v442, %v476
        %vm533 = vcmp.eq.s32.totalorder %v443, %v464
        %vm534 = vcmp.eq.s32.totalorder %v443, %v468
        %vm535 = vcmp.eq.s32.totalorder %v443, %v472
        %vm536 = vcmp.eq.s32.totalorder %v443, %v476
        %vm537 = vcmp.eq.s32.totalorder %v444, %v464
        %vm538 = vcmp.eq.s32.totalorder %v444, %v468
        %vm539 = vcmp.eq.s32.totalorder %v444, %v472
        %vm540 = vcmp.eq.s32.totalorder %v444, %v476
        %vm541 = vcmp.eq.s32.totalorder %v445, %v464
        %vm542 = vcmp.eq.s32.totalorder %v445, %v468
        %vm543 = vcmp.eq.s32.totalorder %v445, %v472
        %vm544 = vcmp.eq.s32.totalorder %v445, %v476
        %vm545 = vcmp.eq.s32.totalorder %v446, %v464
        %vm546 = vcmp.eq.s32.totalorder %v446, %v468
        %vm547 = vcmp.eq.s32.totalorder %v446, %v472
        %vm548 = vcmp.eq.s32.totalorder %v446, %v476
        %vm549 = vcmp.eq.s32.totalorder %v447, %v464
        %vm550 = vcmp.eq.s32.totalorder %v447, %v468
        %vm551 = vcmp.eq.s32.totalorder %v447, %v472
        %vm552 = vcmp.eq.s32.totalorder %v447, %v476
        %vm553 = vcmp.eq.s32.totalorder %v448, %v464
        %vm554 = vcmp.eq.s32.totalorder %v448, %v468
        %vm555 = vcmp.eq.s32.totalorder %v448, %v472
        %vm556 = vcmp.eq.s32.totalorder %v448, %v476
        %vm557 = vcmp.eq.s32.totalorder %v449, %v464
        %vm558 = vcmp.eq.s32.totalorder %v449, %v468
        %vm559 = vcmp.eq.s32.totalorder %v449, %v472
        %vm560 = vcmp.eq.s32.totalorder %v449, %v476
        %vm561 = vcmp.eq.s32.totalorder %v450, %v464
        %vm562 = vcmp.eq.s32.totalorder %v450, %v468
        %vm563 = vcmp.eq.s32.totalorder %v450, %v472
        %vm564 = vcmp.eq.s32.totalorder %v450, %v476
        %vm565 = vcmp.eq.s32.totalorder %v451, %v464
        %vm566 = vcmp.eq.s32.totalorder %v451, %v468
        %vm567 = vcmp.eq.s32.totalorder %v451, %v472
        %vm568 = vcmp.eq.s32.totalorder %v451, %v476
        %vm569 = vcmp.eq.s32.totalorder %v452, %v464
        %vm570 = vcmp.eq.s32.totalorder %v452, %v468
        %vm571 = vcmp.eq.s32.totalorder %v452, %v472
        %vm572 = vcmp.eq.s32.totalorder %v452, %v476
        %vm573 = vcmp.eq.s32.totalorder %v453, %v464
        %vm574 = vcmp.eq.s32.totalorder %v453, %v468
        %vm575 = vcmp.eq.s32.totalorder %v453, %v472
        %vm576 = vcmp.eq.s32.totalorder %v453, %v476
        %vm577 = vcmp.eq.s32.totalorder %v454, %v464
        %vm578 = vcmp.eq.s32.totalorder %v454, %v468
        %vm579 = vcmp.eq.s32.totalorder %v454, %v472
        %vm580 = vcmp.eq.s32.totalorder %v454, %v476
        %vm581 = vcmp.eq.s32.totalorder %v455, %v464
        %vm582 = vcmp.eq.s32.totalorder %v455, %v468
        %vm583 = vcmp.eq.s32.totalorder %v455, %v472
        %vm584 = vcmp.eq.s32.totalorder %v455, %v476
        %vm585 = vcmp.eq.s32.totalorder %v456, %v464
        %vm586 = vcmp.eq.s32.totalorder %v456, %v468
        %vm587 = vcmp.eq.s32.totalorder %v456, %v472
        %vm588 = vcmp.eq.s32.totalorder %v456, %v476
        %vm589 = vcmp.eq.s32.totalorder %v457, %v464
        %vm590 = vcmp.eq.s32.totalorder %v457, %v468
        %vm591 = vcmp.eq.s32.totalorder %v457, %v472
        %vm592 = vcmp.eq.s32.totalorder %v457, %v476
        %vm593 = vcmp.eq.s32.totalorder %v458, %v464
        %vm594 = vcmp.eq.s32.totalorder %v458, %v468
        %vm595 = vcmp.eq.s32.totalorder %v458, %v472
        %vm596 = vcmp.eq.s32.totalorder %v458, %v476
        %vm597 = vcmp.eq.s32.totalorder %v459, %v464
        %vm598 = vcmp.eq.s32.totalorder %v459, %v468
        %vm599 = vcmp.eq.s32.totalorder %v459, %v472
        %vm600 = vcmp.eq.s32.totalorder %v459, %v476
        %vm601 = vcmp.eq.s32.totalorder %v460, %v464
        %vm602 = vcmp.eq.s32.totalorder %v460, %v468
        %vm603 = vcmp.eq.s32.totalorder %v460, %v472
        %vm604 = vcmp.eq.s32.totalorder %v460, %v476
        %v606 = vlaneseq
        %v607 = vshrl.u32 %v606, 7
        %v608 = vsub.s32 0, %v607
        %v609 = vrot.slane %v401, %v608
        %v610 = vlaneseq
        %v611 = vshrl.u32 %v610, 7
        %v612 = vsub.s32 1, %v611
        %v613 = vrot.slane %v401, %v612
        %v614 = vlaneseq
        %v615 = vshrl.u32 %v614, 7
        %v616 = vsub.s32 2, %v615
        %v617 = vrot.slane %v401, %v616
        %v618 = vlaneseq
        %v619 = vshrl.u32 %v618, 7
        %v620 = vsub.s32 3, %v619
        %v621 = vrot.slane %v401, %v620
        %v626 = vsel %vm477, %v609, 0.0
        %v627 = vsel %vm478, %v613, 0.0
        %v628 = vsel %vm479, %v617, 0.0
        %v629 = vsel %vm480, %v621, 0.0
        %v630 = vsel %vm481, %v609, 0.0
        %v631 = vsel %vm482, %v613, 0.0
        %v632 = vsel %vm483, %v617, 0.0
        %v633 = vsel %vm484, %v621, 0.0
        %v634 = vsel %vm485, %v609, 0.0
        %v635 = vsel %vm486, %v613, 0.0
        %v636 = vsel %vm487, %v617, 0.0
        %v637 = vsel %vm488, %v621, 0.0
        %v638 = vsel %vm489, %v609, 0.0
        %v639 = vsel %vm490, %v613, 0.0
        %v640 = vsel %vm491, %v617, 0.0
        %v641 = vsel %vm492, %v621, 0.0
        %v642 = vsel %vm493, %v609, 0.0
        %v643 = vsel %vm494, %v613, 0.0
        %v644 = vsel %vm495, %v617, 0.0
        %v645 = vsel %vm496, %v621, 0.0
        %v646 = vsel %vm497, %v609, 0.0
        %v647 = vsel %vm498, %v613, 0.0
        %v648 = vsel %vm499, %v617, 0.0
        %v649 = vsel %vm500, %v621, 0.0
        %v650 = vsel %vm501, %v609, 0.0
        %v651 = vsel %vm502, %v613, 0.0
        %v652 = vsel %vm503, %v617, 0.0
        %v653 = vsel %vm504, %v621, 0.0
        %v654 = vsel %vm505, %v609, 0.0
        %v655 = vsel %vm506, %v613, 0.0
        %v656 = vsel %vm507, %v617, 0.0
        %v657 = vsel %vm508, %v621, 0.0
        %v658 = vsel %vm509, %v609, 0.0
        %v659 = vsel %vm510, %v613, 0.0
        %v660 = vsel %vm511, %v617, 0.0
        %v661 = vsel %vm512, %v621, 0.0
        %v662 = vsel %vm513, %v609, 0.0
        %v663 = vsel %vm514, %v613, 0.0
        %v664 = vsel %vm515, %v617, 0.0
        %v665 = vsel %vm516, %v621, 0.0
        %v666 = vsel %vm517, %v609, 0.0
        %v667 = vsel %vm518, %v613, 0.0
        %v668 = vsel %vm519, %v617, 0.0
        %v669 = vsel %vm520, %v621, 0.0
        %v670 = vsel %vm521, %v609, 0.0
        %v671 = vsel %vm522, %v613, 0.0
        %v672 = vsel %vm523, %v617, 0.0
        %v673 = vsel %vm524, %v621, 0.0
        %v674 = vsel %vm525, %v609, 0.0
        %v675 = vsel %vm526, %v613, 0.0
        %v676 = vsel %vm527, %v617, 0.0
        %v677 = vsel %vm528, %v621, 0.0
        %v678 = vsel %vm529, %v609, 0.0
        %v679 = vsel %vm530, %v613, 0.0
        %v680 = vsel %vm531, %v617, 0.0
        %v681 = vsel %vm532, %v621, 0.0
        %v682 = vsel %vm533, %v609, 0.0
        %v683 = vsel %vm534, %v613, 0.0
        %v684 = vsel %vm535, %v617, 0.0
        %v685 = vsel %vm536, %v621, 0.0
        %v686 = vsel %vm537, %v609, 0.0
        %v687 = vsel %vm538, %v613, 0.0
        %v688 = vsel %vm539, %v617, 0.0
        %v689 = vsel %vm540, %v621, 0.0
        %v690 = vsel %vm541, %v609, 0.0
        %v691 = vsel %vm542, %v613, 0.0
        %v692 = vsel %vm543, %v617, 0.0
        %v693 = vsel %vm544, %v621, 0.0
        %v694 = vsel %vm545, %v609, 0.0
        %v695 = vsel %vm546, %v613, 0.0
        %v696 = vsel %vm547, %v617, 0.0
        %v697 = vsel %vm548, %v621, 0.0
        %v698 = vsel %vm549, %v609, 0.0
        %v699 = vsel %vm550, %v613, 0.0
        %v700 = vsel %vm551, %v617, 0.0
        %v701 = vsel %vm552, %v621, 0.0
        %v702 = vsel %vm553, %v609, 0.0
        %v703 = vsel %vm554, %v613, 0.0
        %v704 = vsel %vm555, %v617, 0.0
        %v705 = vsel %vm556, %v621, 0.0
        %v706 = vsel %vm557, %v609, 0.0
        %v707 = vsel %vm558, %v613, 0.0
        %v708 = vsel %vm559, %v617, 0.0
        %v709 = vsel %vm560, %v621, 0.0
        %v710 = vsel %vm561, %v609, 0.0
        %v711 = vsel %vm562, %v613, 0.0
        %v712 = vsel %vm563, %v617, 0.0
        %v713 = vsel %vm564, %v621, 0.0
        %v714 = vsel %vm565, %v609, 0.0
        %v715 = vsel %vm566, %v613, 0.0
        %v716 = vsel %vm567, %v617, 0.0
        %v717 = vsel %vm568, %v621, 0.0
        %v718 = vsel %vm569, %v609, 0.0
        %v719 = vsel %vm570, %v613, 0.0
        %v720 = vsel %vm571, %v617, 0.0
        %v721 = vsel %vm572, %v621, 0.0
        %v722 = vsel %vm573, %v609, 0.0
        %v723 = vsel %vm574, %v613, 0.0
        %v724 = vsel %vm575, %v617, 0.0
        %v725 = vsel %vm576, %v621, 0.0
        %v726 = vsel %vm577, %v609, 0.0
        %v727 = vsel %vm578, %v613, 0.0
        %v728 = vsel %vm579, %v617, 0.0
        %v729 = vsel %vm580, %v621, 0.0
        %v730 = vsel %vm581, %v609, 0.0
        %v731 = vsel %vm582, %v613, 0.0
        %v732 = vsel %vm583, %v617, 0.0
        %v733 = vsel %vm584, %v621, 0.0
        %v734 = vsel %vm585, %v609, 0.0
        %v735 = vsel %vm586, %v613, 0.0
        %v736 = vsel %vm587, %v617, 0.0
        %v737 = vsel %vm588, %v621, 0.0
        %v738 = vsel %vm589, %v609, 0.0
        %v739 = vsel %vm590, %v613, 0.0
        %v740 = vsel %vm591, %v617, 0.0
        %v741 = vsel %vm592, %v621, 0.0
        %v742 = vsel %vm593, %v609, 0.0
        %v743 = vsel %vm594, %v613, 0.0
        %v744 = vsel %vm595, %v617, 0.0
        %v745 = vsel %vm596, %v621, 0.0
        %v746 = vsel %vm597, %v609, 0.0
        %v747 = vsel %vm598, %v613, 0.0
        %v748 = vsel %vm599, %v617, 0.0
        %v749 = vsel %vm600, %v621, 0.0
        %v750 = vsel %vm601, %v609, 0.0
        %v751 = vsel %vm602, %v613, 0.0
        %v752 = vsel %vm603, %v617, 0.0
        %v753 = vsel %vm604, %v621, 0.0
        %v754 = vlaneseq
        %v755 = vshrl.u32 %v754, 7
        %v756 = vsub.s32 0, %v755
        %v757 = vrot.slane %v412, %v756
        %v758 = vlaneseq
        %v759 = vshrl.u32 %v758, 7
        %v760 = vsub.s32 1, %v759
        %v761 = vrot.slane %v412, %v760
        %v762 = vlaneseq
        %v763 = vshrl.u32 %v762, 7
        %v764 = vsub.s32 2, %v763
        %v765 = vrot.slane %v412, %v764
        %v766 = vlaneseq
        %v767 = vshrl.u32 %v766, 7
        %v768 = vsub.s32 3, %v767
        %v769 = vrot.slane %v412, %v768
        %vm770 = vcmp.eq.s32.totalorder %v429, %v757
        %vm771 = vcmp.eq.s32.totalorder %v429, %v761
        %vm772 = vcmp.eq.s32.totalorder %v429, %v765
        %vm773 = vcmp.eq.s32.totalorder %v429, %v769
        %vm774 = vcmp.eq.s32.totalorder %v430, %v757
        %vm775 = vcmp.eq.s32.totalorder %v430, %v761
        %vm776 = vcmp.eq.s32.totalorder %v430, %v765
        %vm777 = vcmp.eq.s32.totalorder %v430, %v769
        %vm778 = vcmp.eq.s32.totalorder %v431, %v757
        %vm779 = vcmp.eq.s32.totalorder %v431, %v761
        %vm780 = vcmp.eq.s32.totalorder %v431, %v765
        %vm781 = vcmp.eq.s32.totalorder %v431, %v769
        %vm782 = vcmp.eq.s32.totalorder %v432, %v757
        %vm783 = vcmp.eq.s32.totalorder %v432, %v761
        %vm784 = vcmp.eq.s32.totalorder %v432, %v765
        %vm785 = vcmp.eq.s32.totalorder %v432, %v769
        %vm786 = vcmp.eq.s32.totalorder %v433, %v757
        %vm787 = vcmp.eq.s32.totalorder %v433, %v761
        %vm788 = vcmp.eq.s32.totalorder %v433, %v765
        %vm789 = vcmp.eq.s32.totalorder %v433, %v769
        %vm790 = vcmp.eq.s32.totalorder %v434, %v757
        %vm791 = vcmp.eq.s32.totalorder %v434, %v761
        %vm792 = vcmp.eq.s32.totalorder %v434, %v765
        %vm793 = vcmp.eq.s32.totalorder %v434, %v769
        %vm794 = vcmp.eq.s32.totalorder %v435, %v757
        %vm795 = vcmp.eq.s32.totalorder %v435, %v761
        %vm796 = vcmp.eq.s32.totalorder %v435, %v765
        %vm797 = vcmp.eq.s32.totalorder %v435, %v769
        %vm798 = vcmp.eq.s32.totalorder %v436, %v757
        %vm799 = vcmp.eq.s32.totalorder %v436, %v761
        %vm800 = vcmp.eq.s32.totalorder %v436, %v765
        %vm801 = vcmp.eq.s32.totalorder %v436, %v769
        %vm802 = vcmp.eq.s32.totalorder %v437, %v757
        %vm803 = vcmp.eq.s32.totalorder %v437, %v761
        %vm804 = vcmp.eq.s32.totalorder %v437, %v765
        %vm805 = vcmp.eq.s32.totalorder %v437, %v769
        %vm806 = vcmp.eq.s32.totalorder %v438, %v757
        %vm807 = vcmp.eq.s32.totalorder %v438, %v761
        %vm808 = vcmp.eq.s32.totalorder %v438, %v765
        %vm809 = vcmp.eq.s32.totalorder %v438, %v769
        %vm810 = vcmp.eq.s32.totalorder %v439, %v757
        %vm811 = vcmp.eq.s32.totalorder %v439, %v761
        %vm812 = vcmp.eq.s32.totalorder %v439, %v765
        %vm813 = vcmp.eq.s32.totalorder %v439, %v769
        %vm814 = vcmp.eq.s32.totalorder %v440, %v757
        %vm815 = vcmp.eq.s32.totalorder %v440, %v761
        %vm816 = vcmp.eq.s32.totalorder %v440, %v765
        %vm817 = vcmp.eq.s32.totalorder %v440, %v769
        %vm818 = vcmp.eq.s32.totalorder %v441, %v757
        %vm819 = vcmp.eq.s32.totalorder %v441, %v761
        %vm820 = vcmp.eq.s32.totalorder %v441, %v765
        %vm821 = vcmp.eq.s32.totalorder %v441, %v769
        %vm822 = vcmp.eq.s32.totalorder %v442, %v757
        %vm823 = vcmp.eq.s32.totalorder %v442, %v761
        %vm824 = vcmp.eq.s32.totalorder %v442, %v765
        %vm825 = vcmp.eq.s32.totalorder %v442, %v769
        %vm826 = vcmp.eq.s32.totalorder %v443, %v757
        %vm827 = vcmp.eq.s32.totalorder %v443, %v761
        %vm828 = vcmp.eq.s32.totalorder %v443, %v765
        %vm829 = vcmp.eq.s32.totalorder %v443, %v769
        %vm830 = vcmp.eq.s32.totalorder %v444, %v757
        %vm831 = vcmp.eq.s32.totalorder %v444, %v761
        %vm832 = vcmp.eq.s32.totalorder %v444, %v765
        %vm833 = vcmp.eq.s32.totalorder %v444, %v769
        %vm834 = vcmp.eq.s32.totalorder %v445, %v757
        %vm835 = vcmp.eq.s32.totalorder %v445, %v761
        %vm836 = vcmp.eq.s32.totalorder %v445, %v765
        %vm837 = vcmp.eq.s32.totalorder %v445, %v769
        %vm838 = vcmp.eq.s32.totalorder %v446, %v757
        %vm839 = vcmp.eq.s32.totalorder %v446, %v761
        %vm840 = vcmp.eq.s32.totalorder %v446, %v765
        %vm841 = vcmp.eq.s32.totalorder %v446, %v769
        %vm842 = vcmp.eq.s32.totalorder %v447, %v757
        %vm843 = vcmp.eq.s32.totalorder %v447, %v761
        %vm844 = vcmp.eq.s32.totalorder %v447, %v765
        %vm845 = vcmp.eq.s32.totalorder %v447, %v769
        %vm846 = vcmp.eq.s32.totalorder %v448, %v757
        %vm847 = vcmp.eq.s32.totalorder %v448, %v761
        %vm848 = vcmp.eq.s32.totalorder %v448, %v765
        %vm849 = vcmp.eq.s32.totalorder %v448, %v769
        %vm850 = vcmp.eq.s32.totalorder %v449, %v757
        %vm851 = vcmp.eq.s32.totalorder %v449, %v761
        %vm852 = vcmp.eq.s32.totalorder %v449, %v765
        %vm853 = vcmp.eq.s32.totalorder %v449, %v769
        %vm854 = vcmp.eq.s32.totalorder %v450, %v757
        %vm855 = vcmp.eq.s32.totalorder %v450, %v761
        %vm856 = vcmp.eq.s32.totalorder %v450, %v765
        %vm857 = vcmp.eq.s32.totalorder %v450, %v769
        %vm858 = vcmp.eq.s32.totalorder %v451, %v757
        %vm859 = vcmp.eq.s32.totalorder %v451, %v761
        %vm860 = vcmp.eq.s32.totalorder %v451, %v765
        %vm861 = vcmp.eq.s32.totalorder %v451, %v769
        %vm862 = vcmp.eq.s32.totalorder %v452, %v757
        %vm863 = vcmp.eq.s32.totalorder %v452, %v761
        %vm864 = vcmp.eq.s32.totalorder %v452, %v765
        %vm865 = vcmp.eq.s32.totalorder %v452, %v769
        %vm866 = vcmp.eq.s32.totalorder %v453, %v757
        %vm867 = vcmp.eq.s32.totalorder %v453, %v761
        %vm868 = vcmp.eq.s32.totalorder %v453, %v765
        %vm869 = vcmp.eq.s32.totalorder %v453, %v769
        %vm870 = vcmp.eq.s32.totalorder %v454, %v757
        %vm871 = vcmp.eq.s32.totalorder %v454, %v761
        %vm872 = vcmp.eq.s32.totalorder %v454, %v765
        %vm873 = vcmp.eq.s32.totalorder %v454, %v769
        %vm874 = vcmp.eq.s32.totalorder %v455, %v757
        %vm875 = vcmp.eq.s32.totalorder %v455, %v761
        %vm876 = vcmp.eq.s32.totalorder %v455, %v765
        %vm877 = vcmp.eq.s32.totalorder %v455, %v769
        %vm878 = vcmp.eq.s32.totalorder %v456, %v757
        %vm879 = vcmp.eq.s32.totalorder %v456, %v761
        %vm880 = vcmp.eq.s32.totalorder %v456, %v765
        %vm881 = vcmp.eq.s32.totalorder %v456, %v769
        %vm882 = vcmp.eq.s32.totalorder %v457, %v757
        %vm883 = vcmp.eq.s32.totalorder %v457, %v761
        %vm884 = vcmp.eq.s32.totalorder %v457, %v765
        %vm885 = vcmp.eq.s32.totalorder %v457, %v769
        %vm886 = vcmp.eq.s32.totalorder %v458, %v757
        %vm887 = vcmp.eq.s32.totalorder %v458, %v761
        %vm888 = vcmp.eq.s32.totalorder %v458, %v765
        %vm889 = vcmp.eq.s32.totalorder %v458, %v769
        %vm890 = vcmp.eq.s32.totalorder %v459, %v757
        %vm891 = vcmp.eq.s32.totalorder %v459, %v761
        %vm892 = vcmp.eq.s32.totalorder %v459, %v765
        %vm893 = vcmp.eq.s32.totalorder %v459, %v769
        %vm894 = vcmp.eq.s32.totalorder %v460, %v757
        %vm895 = vcmp.eq.s32.totalorder %v460, %v761
        %vm896 = vcmp.eq.s32.totalorder %v460, %v765
        %vm897 = vcmp.eq.s32.totalorder %v460, %v769
        %v899 = vlaneseq
        %v900 = vshrl.u32 %v899, 7
        %v901 = vsub.s32 0, %v900
        %v902 = vrot.slane %v411, %v901
        %v903 = vlaneseq
        %v904 = vshrl.u32 %v903, 7
        %v905 = vsub.s32 1, %v904
        %v906 = vrot.slane %v411, %v905
        %v907 = vlaneseq
        %v908 = vshrl.u32 %v907, 7
        %v909 = vsub.s32 2, %v908
        %v910 = vrot.slane %v411, %v909
        %v911 = vlaneseq
        %v912 = vshrl.u32 %v911, 7
        %v913 = vsub.s32 3, %v912
        %v914 = vrot.slane %v411, %v913
        %v919 = vsel %vm770, %v902, 0.0
        %v920 = vsel %vm771, %v906, 0.0
        %v921 = vsel %vm772, %v910, 0.0
        %v922 = vsel %vm773, %v914, 0.0
        %v923 = vsel %vm774, %v902, 0.0
        %v924 = vsel %vm775, %v906, 0.0
        %v925 = vsel %vm776, %v910, 0.0
        %v926 = vsel %vm777, %v914, 0.0
        %v927 = vsel %vm778, %v902, 0.0
        %v928 = vsel %vm779, %v906, 0.0
        %v929 = vsel %vm780, %v910, 0.0
        %v930 = vsel %vm781, %v914, 0.0
        %v931 = vsel %vm782, %v902, 0.0
        %v932 = vsel %vm783, %v906, 0.0
        %v933 = vsel %vm784, %v910, 0.0
        %v934 = vsel %vm785, %v914, 0.0
        %v935 = vsel %vm786, %v902, 0.0
        %v936 = vsel %vm787, %v906, 0.0
        %v937 = vsel %vm788, %v910, 0.0
        %v938 = vsel %vm789, %v914, 0.0
        %v939 = vsel %vm790, %v902, 0.0
        %v940 = vsel %vm791, %v906, 0.0
        %v941 = vsel %vm792, %v910, 0.0
        %v942 = vsel %vm793, %v914, 0.0
        %v943 = vsel %vm794, %v902, 0.0
        %v944 = vsel %vm795, %v906, 0.0
        %v945 = vsel %vm796, %v910, 0.0
        %v946 = vsel %vm797, %v914, 0.0
        %v947 = vsel %vm798, %v902, 0.0
        %v948 = vsel %vm799, %v906, 0.0
        %v949 = vsel %vm800, %v910, 0.0
        %v950 = vsel %vm801, %v914, 0.0
        %v951 = vsel %vm802, %v902, 0.0
        %v952 = vsel %vm803, %v906, 0.0
        %v953 = vsel %vm804, %v910, 0.0
        %v954 = vsel %vm805, %v914, 0.0
        %v955 = vsel %vm806, %v902, 0.0
        %v956 = vsel %vm807, %v906, 0.0
        %v957 = vsel %vm808, %v910, 0.0
        %v958 = vsel %vm809, %v914, 0.0
        %v959 = vsel %vm810, %v902, 0.0
        %v960 = vsel %vm811, %v906, 0.0
        %v961 = vsel %vm812, %v910, 0.0
        %v962 = vsel %vm813, %v914, 0.0
        %v963 = vsel %vm814, %v902, 0.0
        %v964 = vsel %vm815, %v906, 0.0
        %v965 = vsel %vm816, %v910, 0.0
        %v966 = vsel %vm817, %v914, 0.0
        %v967 = vsel %vm818, %v902, 0.0
        %v968 = vsel %vm819, %v906, 0.0
        %v969 = vsel %vm820, %v910, 0.0
        %v970 = vsel %vm821, %v914, 0.0
        %v971 = vsel %vm822, %v902, 0.0
        %v972 = vsel %vm823, %v906, 0.0
        %v973 = vsel %vm824, %v910, 0.0
        %v974 = vsel %vm825, %v914, 0.0
        %v975 = vsel %vm826, %v902, 0.0
        %v976 = vsel %vm827, %v906, 0.0
        %v977 = vsel %vm828, %v910, 0.0
        %v978 = vsel %vm829, %v914, 0.0
        %v979 = vsel %vm830, %v902, 0.0
        %v980 = vsel %vm831, %v906, 0.0
        %v981 = vsel %vm832, %v910, 0.0
        %v982 = vsel %vm833, %v914, 0.0
        %v983 = vsel %vm834, %v902, 0.0
        %v984 = vsel %vm835, %v906, 0.0
        %v985 = vsel %vm836, %v910, 0.0
        %v986 = vsel %vm837, %v914, 0.0
        %v987 = vsel %vm838, %v902, 0.0
        %v988 = vsel %vm839, %v906, 0.0
        %v989 = vsel %vm840, %v910, 0.0
        %v990 = vsel %vm841, %v914, 0.0
        %v991 = vsel %vm842, %v902, 0.0
        %v992 = vsel %vm843, %v906, 0.0
        %v993 = vsel %vm844, %v910, 0.0
        %v994 = vsel %vm845, %v914, 0.0
        %v995 = vsel %vm846, %v902, 0.0
        %v996 = vsel %vm847, %v906, 0.0
        %v997 = vsel %vm848, %v910, 0.0
        %v998 = vsel %vm849, %v914, 0.0
        %v999 = vsel %vm850, %v902, 0.0
        %v1000 = vsel %vm851, %v906, 0.0
        %v1001 = vsel %vm852, %v910, 0.0
        %v1002 = vsel %vm853, %v914, 0.0
        %v1003 = vsel %vm854, %v902, 0.0
        %v1004 = vsel %vm855, %v906, 0.0
        %v1005 = vsel %vm856, %v910, 0.0
        %v1006 = vsel %vm857, %v914, 0.0
        %v1007 = vsel %vm858, %v902, 0.0
        %v1008 = vsel %vm859, %v906, 0.0
        %v1009 = vsel %vm860, %v910, 0.0
        %v1010 = vsel %vm861, %v914, 0.0
        %v1011 = vsel %vm862, %v902, 0.0
        %v1012 = vsel %vm863, %v906, 0.0
        %v1013 = vsel %vm864, %v910, 0.0
        %v1014 = vsel %vm865, %v914, 0.0
        %v1015 = vsel %vm866, %v902, 0.0
        %v1016 = vsel %vm867, %v906, 0.0
        %v1017 = vsel %vm868, %v910, 0.0
        %v1018 = vsel %vm869, %v914, 0.0
        %v1019 = vsel %vm870, %v902, 0.0
        %v1020 = vsel %vm871, %v906, 0.0
        %v1021 = vsel %vm872, %v910, 0.0
        %v1022 = vsel %vm873, %v914, 0.0
        %v1023 = vsel %vm874, %v902, 0.0
        %v1024 = vsel %vm875, %v906, 0.0
        %v1025 = vsel %vm876, %v910, 0.0
        %v1026 = vsel %vm877, %v914, 0.0
        %v1027 = vsel %vm878, %v902, 0.0
        %v1028 = vsel %vm879, %v906, 0.0
        %v1029 = vsel %vm880, %v910, 0.0
        %v1030 = vsel %vm881, %v914, 0.0
        %v1031 = vsel %vm882, %v902, 0.0
        %v1032 = vsel %vm883, %v906, 0.0
        %v1033 = vsel %vm884, %v910, 0.0
        %v1034 = vsel %vm885, %v914, 0.0
        %v1035 = vsel %vm886, %v902, 0.0
        %v1036 = vsel %vm887, %v906, 0.0
        %v1037 = vsel %vm888, %v910, 0.0
        %v1038 = vsel %vm889, %v914, 0.0
        %v1039 = vsel %vm890, %v902, 0.0
        %v1040 = vsel %vm891, %v906, 0.0
        %v1041 = vsel %vm892, %v910, 0.0
        %v1042 = vsel %vm893, %v914, 0.0
        %v1043 = vsel %vm894, %v902, 0.0
        %v1044 = vsel %vm895, %v906, 0.0
        %v1045 = vsel %vm896, %v910, 0.0
        %v1046 = vsel %vm897, %v914, 0.0
        %v1047 = vadd.f32 %v626, %v919
        %v1048 = vadd.f32 %v627, %v920
        %v1049 = vadd.f32 %v628, %v921
        %v1050 = vadd.f32 %v629, %v922
        %v1051 = vadd.f32 %v630, %v923
        %v1052 = vadd.f32 %v631, %v924
        %v1053 = vadd.f32 %v632, %v925
        %v1054 = vadd.f32 %v633, %v926
        %v1055 = vadd.f32 %v634, %v927
        %v1056 = vadd.f32 %v635, %v928
        %v1057 = vadd.f32 %v636, %v929
        %v1058 = vadd.f32 %v637, %v930
        %v1059 = vadd.f32 %v638, %v931
        %v1060 = vadd.f32 %v639, %v932
        %v1061 = vadd.f32 %v640, %v933
        %v1062 = vadd.f32 %v641, %v934
        %v1063 = vadd.f32 %v642, %v935
        %v1064 = vadd.f32 %v643, %v936
        %v1065 = vadd.f32 %v644, %v937
        %v1066 = vadd.f32 %v645, %v938
        %v1067 = vadd.f32 %v646, %v939
        %v1068 = vadd.f32 %v647, %v940
        %v1069 = vadd.f32 %v648, %v941
        %v1070 = vadd.f32 %v649, %v942
        %v1071 = vadd.f32 %v650, %v943
        %v1072 = vadd.f32 %v651, %v944
        %v1073 = vadd.f32 %v652, %v945
        %v1074 = vadd.f32 %v653, %v946
        %v1075 = vadd.f32 %v654, %v947
        %v1076 = vadd.f32 %v655, %v948
        %v1077 = vadd.f32 %v656, %v949
        %v1078 = vadd.f32 %v657, %v950
        %v1079 = vadd.f32 %v658, %v951
        %v1080 = vadd.f32 %v659, %v952
        %v1081 = vadd.f32 %v660, %v953
        %v1082 = vadd.f32 %v661, %v954
        %v1083 = vadd.f32 %v662, %v955
        %v1084 = vadd.f32 %v663, %v956
        %v1085 = vadd.f32 %v664, %v957
        %v1086 = vadd.f32 %v665, %v958
        %v1087 = vadd.f32 %v666, %v959
        %v1088 = vadd.f32 %v667, %v960
        %v1089 = vadd.f32 %v668, %v961
        %v1090 = vadd.f32 %v669, %v962
        %v1091 = vadd.f32 %v670, %v963
        %v1092 = vadd.f32 %v671, %v964
        %v1093 = vadd.f32 %v672, %v965
        %v1094 = vadd.f32 %v673, %v966
        %v1095 = vadd.f32 %v674, %v967
        %v1096 = vadd.f32 %v675, %v968
        %v1097 = vadd.f32 %v676, %v969
        %v1098 = vadd.f32 %v677, %v970
        %v1099 = vadd.f32 %v678, %v971
        %v1100 = vadd.f32 %v679, %v972
        %v1101 = vadd.f32 %v680, %v973
        %v1102 = vadd.f32 %v681, %v974
        %v1103 = vadd.f32 %v682, %v975
        %v1104 = vadd.f32 %v683, %v976
        %v1105 = vadd.f32 %v684, %v977
        %v1106 = vadd.f32 %v685, %v978
        %v1107 = vadd.f32 %v686, %v979
        %v1108 = vadd.f32 %v687, %v980
        %v1109 = vadd.f32 %v688, %v981
        %v1110 = vadd.f32 %v689, %v982
        %v1111 = vadd.f32 %v690, %v983
        %v1112 = vadd.f32 %v691, %v984
        %v1113 = vadd.f32 %v692, %v985
        %v1114 = vadd.f32 %v693, %v986
        %v1115 = vadd.f32 %v694, %v987
        %v1116 = vadd.f32 %v695, %v988
        %v1117 = vadd.f32 %v696, %v989
        %v1118 = vadd.f32 %v697, %v990
        %v1119 = vadd.f32 %v698, %v991
        %v1120 = vadd.f32 %v699, %v992
        %v1121 = vadd.f32 %v700, %v993
        %v1122 = vadd.f32 %v701, %v994
        %v1123 = vadd.f32 %v702, %v995
        %v1124 = vadd.f32 %v703, %v996
        %v1125 = vadd.f32 %v704, %v997
        %v1126 = vadd.f32 %v705, %v998
        %v1127 = vadd.f32 %v706, %v999
        %v1128 = vadd.f32 %v707, %v1000
        %v1129 = vadd.f32 %v708, %v1001
        %v1130 = vadd.f32 %v709, %v1002
        %v1131 = vadd.f32 %v710, %v1003
        %v1132 = vadd.f32 %v711, %v1004
        %v1133 = vadd.f32 %v712, %v1005
        %v1134 = vadd.f32 %v713, %v1006
        %v1135 = vadd.f32 %v714, %v1007
        %v1136 = vadd.f32 %v715, %v1008
        %v1137 = vadd.f32 %v716, %v1009
        %v1138 = vadd.f32 %v717, %v1010
        %v1139 = vadd.f32 %v718, %v1011
        %v1140 = vadd.f32 %v719, %v1012
        %v1141 = vadd.f32 %v720, %v1013
        %v1142 = vadd.f32 %v721, %v1014
        %v1143 = vadd.f32 %v722, %v1015
        %v1144 = vadd.f32 %v723, %v1016
        %v1145 = vadd.f32 %v724, %v1017
        %v1146 = vadd.f32 %v725, %v1018
        %v1147 = vadd.f32 %v726, %v1019
        %v1148 = vadd.f32 %v727, %v1020
        %v1149 = vadd.f32 %v728, %v1021
        %v1150 = vadd.f32 %v729, %v1022
        %v1151 = vadd.f32 %v730, %v1023
        %v1152 = vadd.f32 %v731, %v1024
        %v1153 = vadd.f32 %v732, %v1025
        %v1154 = vadd.f32 %v733, %v1026
        %v1155 = vadd.f32 %v734, %v1027
        %v1156 = vadd.f32 %v735, %v1028
        %v1157 = vadd.f32 %v736, %v1029
        %v1158 = vadd.f32 %v737, %v1030
        %v1159 = vadd.f32 %v738, %v1031
        %v1160 = vadd.f32 %v739, %v1032
        %v1161 = vadd.f32 %v740, %v1033
        %v1162 = vadd.f32 %v741, %v1034
        %v1163 = vadd.f32 %v742, %v1035
        %v1164 = vadd.f32 %v743, %v1036
        %v1165 = vadd.f32 %v744, %v1037
        %v1166 = vadd.f32 %v745, %v1038
        %v1167 = vadd.f32 %v746, %v1039
        %v1168 = vadd.f32 %v747, %v1040
        %v1169 = vadd.f32 %v748, %v1041
        %v1170 = vadd.f32 %v749, %v1042
        %v1171 = vadd.f32 %v750, %v1043
        %v1172 = vadd.f32 %v751, %v1044
        %v1173 = vadd.f32 %v752, %v1045
        %v1174 = vadd.f32 %v753, %v1046
        %v1175 = vlaneseq
        %v1176 = vshrl.u32 %v1175, 7
        %v1177 = vsub.s32 0, %v1176
        %v1178 = vrot.slane %v421, %v1177
        %v1179 = vlaneseq
        %v1180 = vshrl.u32 %v1179, 7
        %v1181 = vsub.s32 1, %v1180
        %v1182 = vrot.slane %v421, %v1181
        %v1183 = vlaneseq
        %v1184 = vshrl.u32 %v1183, 7
        %v1185 = vsub.s32 2, %v1184
        %v1186 = vrot.slane %v421, %v1185
        %v1187 = vlaneseq
        %v1188 = vshrl.u32 %v1187, 7
        %v1189 = vsub.s32 3, %v1188
        %v1190 = vrot.slane %v421, %v1189
        %vm1191 = vcmp.eq.s32.totalorder %v429, %v1178
        %vm1192 = vcmp.eq.s32.totalorder %v429, %v1182
        %vm1193 = vcmp.eq.s32.totalorder %v429, %v1186
        %vm1194 = vcmp.eq.s32.totalorder %v429, %v1190
        %vm1195 = vcmp.eq.s32.totalorder %v430, %v1178
        %vm1196 = vcmp.eq.s32.totalorder %v430, %v1182
        %vm1197 = vcmp.eq.s32.totalorder %v430, %v1186
        %vm1198 = vcmp.eq.s32.totalorder %v430, %v1190
        %vm1199 = vcmp.eq.s32.totalorder %v431, %v1178
        %vm1200 = vcmp.eq.s32.totalorder %v431, %v1182
        %vm1201 = vcmp.eq.s32.totalorder %v431, %v1186
        %vm1202 = vcmp.eq.s32.totalorder %v431, %v1190
        %vm1203 = vcmp.eq.s32.totalorder %v432, %v1178
        %vm1204 = vcmp.eq.s32.totalorder %v432, %v1182
        %vm1205 = vcmp.eq.s32.totalorder %v432, %v1186
        %vm1206 = vcmp.eq.s32.totalorder %v432, %v1190
        %vm1207 = vcmp.eq.s32.totalorder %v433, %v1178
        %vm1208 = vcmp.eq.s32.totalorder %v433, %v1182
        %vm1209 = vcmp.eq.s32.totalorder %v433, %v1186
        %vm1210 = vcmp.eq.s32.totalorder %v433, %v1190
        %vm1211 = vcmp.eq.s32.totalorder %v434, %v1178
        %vm1212 = vcmp.eq.s32.totalorder %v434, %v1182
        %vm1213 = vcmp.eq.s32.totalorder %v434, %v1186
        %vm1214 = vcmp.eq.s32.totalorder %v434, %v1190
        %vm1215 = vcmp.eq.s32.totalorder %v435, %v1178
        %vm1216 = vcmp.eq.s32.totalorder %v435, %v1182
        %vm1217 = vcmp.eq.s32.totalorder %v435, %v1186
        %vm1218 = vcmp.eq.s32.totalorder %v435, %v1190
        %vm1219 = vcmp.eq.s32.totalorder %v436, %v1178
        %vm1220 = vcmp.eq.s32.totalorder %v436, %v1182
        %vm1221 = vcmp.eq.s32.totalorder %v436, %v1186
        %vm1222 = vcmp.eq.s32.totalorder %v436, %v1190
        %vm1223 = vcmp.eq.s32.totalorder %v437, %v1178
        %vm1224 = vcmp.eq.s32.totalorder %v437, %v1182
        %vm1225 = vcmp.eq.s32.totalorder %v437, %v1186
        %vm1226 = vcmp.eq.s32.totalorder %v437, %v1190
        %vm1227 = vcmp.eq.s32.totalorder %v438, %v1178
        %vm1228 = vcmp.eq.s32.totalorder %v438, %v1182
        %vm1229 = vcmp.eq.s32.totalorder %v438, %v1186
        %vm1230 = vcmp.eq.s32.totalorder %v438, %v1190
        %vm1231 = vcmp.eq.s32.totalorder %v439, %v1178
        %vm1232 = vcmp.eq.s32.totalorder %v439, %v1182
        %vm1233 = vcmp.eq.s32.totalorder %v439, %v1186
        %vm1234 = vcmp.eq.s32.totalorder %v439, %v1190
        %vm1235 = vcmp.eq.s32.totalorder %v440, %v1178
        %vm1236 = vcmp.eq.s32.totalorder %v440, %v1182
        %vm1237 = vcmp.eq.s32.totalorder %v440, %v1186
        %vm1238 = vcmp.eq.s32.totalorder %v440, %v1190
        %vm1239 = vcmp.eq.s32.totalorder %v441, %v1178
        %vm1240 = vcmp.eq.s32.totalorder %v441, %v1182
        %vm1241 = vcmp.eq.s32.totalorder %v441, %v1186
        %vm1242 = vcmp.eq.s32.totalorder %v441, %v1190
        %vm1243 = vcmp.eq.s32.totalorder %v442, %v1178
        %vm1244 = vcmp.eq.s32.totalorder %v442, %v1182
        %vm1245 = vcmp.eq.s32.totalorder %v442, %v1186
        %vm1246 = vcmp.eq.s32.totalorder %v442, %v1190
        %vm1247 = vcmp.eq.s32.totalorder %v443, %v1178
        %vm1248 = vcmp.eq.s32.totalorder %v443, %v1182
        %vm1249 = vcmp.eq.s32.totalorder %v443, %v1186
        %vm1250 = vcmp.eq.s32.totalorder %v443, %v1190
        %vm1251 = vcmp.eq.s32.totalorder %v444, %v1178
        %vm1252 = vcmp.eq.s32.totalorder %v444, %v1182
        %vm1253 = vcmp.eq.s32.totalorder %v444, %v1186
        %vm1254 = vcmp.eq.s32.totalorder %v444, %v1190
        %vm1255 = vcmp.eq.s32.totalorder %v445, %v1178
        %vm1256 = vcmp.eq.s32.totalorder %v445, %v1182
        %vm1257 = vcmp.eq.s32.totalorder %v445, %v1186
        %vm1258 = vcmp.eq.s32.totalorder %v445, %v1190
        %vm1259 = vcmp.eq.s32.totalorder %v446, %v1178
        %vm1260 = vcmp.eq.s32.totalorder %v446, %v1182
        %vm1261 = vcmp.eq.s32.totalorder %v446, %v1186
        %vm1262 = vcmp.eq.s32.totalorder %v446, %v1190
        %vm1263 = vcmp.eq.s32.totalorder %v447, %v1178
        %vm1264 = vcmp.eq.s32.totalorder %v447, %v1182
        %vm1265 = vcmp.eq.s32.totalorder %v447, %v1186
        %vm1266 = vcmp.eq.s32.totalorder %v447, %v1190
        %vm1267 = vcmp.eq.s32.totalorder %v448, %v1178
        %vm1268 = vcmp.eq.s32.totalorder %v448, %v1182
        %vm1269 = vcmp.eq.s32.totalorder %v448, %v1186
        %vm1270 = vcmp.eq.s32.totalorder %v448, %v1190
        %vm1271 = vcmp.eq.s32.totalorder %v449, %v1178
        %vm1272 = vcmp.eq.s32.totalorder %v449, %v1182
        %vm1273 = vcmp.eq.s32.totalorder %v449, %v1186
        %vm1274 = vcmp.eq.s32.totalorder %v449, %v1190
        %vm1275 = vcmp.eq.s32.totalorder %v450, %v1178
        %vm1276 = vcmp.eq.s32.totalorder %v450, %v1182
        %vm1277 = vcmp.eq.s32.totalorder %v450, %v1186
        %vm1278 = vcmp.eq.s32.totalorder %v450, %v1190
        %vm1279 = vcmp.eq.s32.totalorder %v451, %v1178
        %vm1280 = vcmp.eq.s32.totalorder %v451, %v1182
        %vm1281 = vcmp.eq.s32.totalorder %v451, %v1186
        %vm1282 = vcmp.eq.s32.totalorder %v451, %v1190
        %vm1283 = vcmp.eq.s32.totalorder %v452, %v1178
        %vm1284 = vcmp.eq.s32.totalorder %v452, %v1182
        %vm1285 = vcmp.eq.s32.totalorder %v452, %v1186
        %vm1286 = vcmp.eq.s32.totalorder %v452, %v1190
        %vm1287 = vcmp.eq.s32.totalorder %v453, %v1178
        %vm1288 = vcmp.eq.s32.totalorder %v453, %v1182
        %vm1289 = vcmp.eq.s32.totalorder %v453, %v1186
        %vm1290 = vcmp.eq.s32.totalorder %v453, %v1190
        %vm1291 = vcmp.eq.s32.totalorder %v454, %v1178
        %vm1292 = vcmp.eq.s32.totalorder %v454, %v1182
        %vm1293 = vcmp.eq.s32.totalorder %v454, %v1186
        %vm1294 = vcmp.eq.s32.totalorder %v454, %v1190
        %vm1295 = vcmp.eq.s32.totalorder %v455, %v1178
        %vm1296 = vcmp.eq.s32.totalorder %v455, %v1182
        %vm1297 = vcmp.eq.s32.totalorder %v455, %v1186
        %vm1298 = vcmp.eq.s32.totalorder %v455, %v1190
        %vm1299 = vcmp.eq.s32.totalorder %v456, %v1178
        %vm1300 = vcmp.eq.s32.totalorder %v456, %v1182
        %vm1301 = vcmp.eq.s32.totalorder %v456, %v1186
        %vm1302 = vcmp.eq.s32.totalorder %v456, %v1190
        %vm1303 = vcmp.eq.s32.totalorder %v457, %v1178
        %vm1304 = vcmp.eq.s32.totalorder %v457, %v1182
        %vm1305 = vcmp.eq.s32.totalorder %v457, %v1186
        %vm1306 = vcmp.eq.s32.totalorder %v457, %v1190
        %vm1307 = vcmp.eq.s32.totalorder %v458, %v1178
        %vm1308 = vcmp.eq.s32.totalorder %v458, %v1182
        %vm1309 = vcmp.eq.s32.totalorder %v458, %v1186
        %vm1310 = vcmp.eq.s32.totalorder %v458, %v1190
        %vm1311 = vcmp.eq.s32.totalorder %v459, %v1178
        %vm1312 = vcmp.eq.s32.totalorder %v459, %v1182
        %vm1313 = vcmp.eq.s32.totalorder %v459, %v1186
        %vm1314 = vcmp.eq.s32.totalorder %v459, %v1190
        %vm1315 = vcmp.eq.s32.totalorder %v460, %v1178
        %vm1316 = vcmp.eq.s32.totalorder %v460, %v1182
        %vm1317 = vcmp.eq.s32.totalorder %v460, %v1186
        %vm1318 = vcmp.eq.s32.totalorder %v460, %v1190
        %v1320 = vlaneseq
        %v1321 = vshrl.u32 %v1320, 7
        %v1322 = vsub.s32 0, %v1321
        %v1323 = vrot.slane %v419, %v1322
        %v1324 = vlaneseq
        %v1325 = vshrl.u32 %v1324, 7
        %v1326 = vsub.s32 1, %v1325
        %v1327 = vrot.slane %v419, %v1326
        %v1328 = vlaneseq
        %v1329 = vshrl.u32 %v1328, 7
        %v1330 = vsub.s32 2, %v1329
        %v1331 = vrot.slane %v419, %v1330
        %v1332 = vlaneseq
        %v1333 = vshrl.u32 %v1332, 7
        %v1334 = vsub.s32 3, %v1333
        %v1335 = vrot.slane %v419, %v1334
        %v1340 = vsel %vm1191, %v1323, 0.0
        %v1341 = vsel %vm1192, %v1327, 0.0
        %v1342 = vsel %vm1193, %v1331, 0.0
        %v1343 = vsel %vm1194, %v1335, 0.0
        %v1344 = vsel %vm1195, %v1323, 0.0
        %v1345 = vsel %vm1196, %v1327, 0.0
        %v1346 = vsel %vm1197, %v1331, 0.0
        %v1347 = vsel %vm1198, %v1335, 0.0
        %v1348 = vsel %vm1199, %v1323, 0.0
        %v1349 = vsel %vm1200, %v1327, 0.0
        %v1350 = vsel %vm1201, %v1331, 0.0
        %v1351 = vsel %vm1202, %v1335, 0.0
        %v1352 = vsel %vm1203, %v1323, 0.0
        %v1353 = vsel %vm1204, %v1327, 0.0
        %v1354 = vsel %vm1205, %v1331, 0.0
        %v1355 = vsel %vm1206, %v1335, 0.0
        %v1356 = vsel %vm1207, %v1323, 0.0
        %v1357 = vsel %vm1208, %v1327, 0.0
        %v1358 = vsel %vm1209, %v1331, 0.0
        %v1359 = vsel %vm1210, %v1335, 0.0
        %v1360 = vsel %vm1211, %v1323, 0.0
        %v1361 = vsel %vm1212, %v1327, 0.0
        %v1362 = vsel %vm1213, %v1331, 0.0
        %v1363 = vsel %vm1214, %v1335, 0.0
        %v1364 = vsel %vm1215, %v1323, 0.0
        %v1365 = vsel %vm1216, %v1327, 0.0
        %v1366 = vsel %vm1217, %v1331, 0.0
        %v1367 = vsel %vm1218, %v1335, 0.0
        %v1368 = vsel %vm1219, %v1323, 0.0
        %v1369 = vsel %vm1220, %v1327, 0.0
        %v1370 = vsel %vm1221, %v1331, 0.0
        %v1371 = vsel %vm1222, %v1335, 0.0
        %v1372 = vsel %vm1223, %v1323, 0.0
        %v1373 = vsel %vm1224, %v1327, 0.0
        %v1374 = vsel %vm1225, %v1331, 0.0
        %v1375 = vsel %vm1226, %v1335, 0.0
        %v1376 = vsel %vm1227, %v1323, 0.0
        %v1377 = vsel %vm1228, %v1327, 0.0
        %v1378 = vsel %vm1229, %v1331, 0.0
        %v1379 = vsel %vm1230, %v1335, 0.0
        %v1380 = vsel %vm1231, %v1323, 0.0
        %v1381 = vsel %vm1232, %v1327, 0.0
        %v1382 = vsel %vm1233, %v1331, 0.0
        %v1383 = vsel %vm1234, %v1335, 0.0
        %v1384 = vsel %vm1235, %v1323, 0.0
        %v1385 = vsel %vm1236, %v1327, 0.0
        %v1386 = vsel %vm1237, %v1331, 0.0
        %v1387 = vsel %vm1238, %v1335, 0.0
        %v1388 = vsel %vm1239, %v1323, 0.0
        %v1389 = vsel %vm1240, %v1327, 0.0
        %v1390 = vsel %vm1241, %v1331, 0.0
        %v1391 = vsel %vm1242, %v1335, 0.0
        %v1392 = vsel %vm1243, %v1323, 0.0
        %v1393 = vsel %vm1244, %v1327, 0.0
        %v1394 = vsel %vm1245, %v1331, 0.0
        %v1395 = vsel %vm1246, %v1335, 0.0
        %v1396 = vsel %vm1247, %v1323, 0.0
        %v1397 = vsel %vm1248, %v1327, 0.0
        %v1398 = vsel %vm1249, %v1331, 0.0
        %v1399 = vsel %vm1250, %v1335, 0.0
        %v1400 = vsel %vm1251, %v1323, 0.0
        %v1401 = vsel %vm1252, %v1327, 0.0
        %v1402 = vsel %vm1253, %v1331, 0.0
        %v1403 = vsel %vm1254, %v1335, 0.0
        %v1404 = vsel %vm1255, %v1323, 0.0
        %v1405 = vsel %vm1256, %v1327, 0.0
        %v1406 = vsel %vm1257, %v1331, 0.0
        %v1407 = vsel %vm1258, %v1335, 0.0
        %v1408 = vsel %vm1259, %v1323, 0.0
        %v1409 = vsel %vm1260, %v1327, 0.0
        %v1410 = vsel %vm1261, %v1331, 0.0
        %v1411 = vsel %vm1262, %v1335, 0.0
        %v1412 = vsel %vm1263, %v1323, 0.0
        %v1413 = vsel %vm1264, %v1327, 0.0
        %v1414 = vsel %vm1265, %v1331, 0.0
        %v1415 = vsel %vm1266, %v1335, 0.0
        %v1416 = vsel %vm1267, %v1323, 0.0
        %v1417 = vsel %vm1268, %v1327, 0.0
        %v1418 = vsel %vm1269, %v1331, 0.0
        %v1419 = vsel %vm1270, %v1335, 0.0
        %v1420 = vsel %vm1271, %v1323, 0.0
        %v1421 = vsel %vm1272, %v1327, 0.0
        %v1422 = vsel %vm1273, %v1331, 0.0
        %v1423 = vsel %vm1274, %v1335, 0.0
        %v1424 = vsel %vm1275, %v1323, 0.0
        %v1425 = vsel %vm1276, %v1327, 0.0
        %v1426 = vsel %vm1277, %v1331, 0.0
        %v1427 = vsel %vm1278, %v1335, 0.0
        %v1428 = vsel %vm1279, %v1323, 0.0
        %v1429 = vsel %vm1280, %v1327, 0.0
        %v1430 = vsel %vm1281, %v1331, 0.0
        %v1431 = vsel %vm1282, %v1335, 0.0
        %v1432 = vsel %vm1283, %v1323, 0.0
        %v1433 = vsel %vm1284, %v1327, 0.0
        %v1434 = vsel %vm1285, %v1331, 0.0
        %v1435 = vsel %vm1286, %v1335, 0.0
        %v1436 = vsel %vm1287, %v1323, 0.0
        %v1437 = vsel %vm1288, %v1327, 0.0
        %v1438 = vsel %vm1289, %v1331, 0.0
        %v1439 = vsel %vm1290, %v1335, 0.0
        %v1440 = vsel %vm1291, %v1323, 0.0
        %v1441 = vsel %vm1292, %v1327, 0.0
        %v1442 = vsel %vm1293, %v1331, 0.0
        %v1443 = vsel %vm1294, %v1335, 0.0
        %v1444 = vsel %vm1295, %v1323, 0.0
        %v1445 = vsel %vm1296, %v1327, 0.0
        %v1446 = vsel %vm1297, %v1331, 0.0
        %v1447 = vsel %vm1298, %v1335, 0.0
        %v1448 = vsel %vm1299, %v1323, 0.0
        %v1449 = vsel %vm1300, %v1327, 0.0
        %v1450 = vsel %vm1301, %v1331, 0.0
        %v1451 = vsel %vm1302, %v1335, 0.0
        %v1452 = vsel %vm1303, %v1323, 0.0
        %v1453 = vsel %vm1304, %v1327, 0.0
        %v1454 = vsel %vm1305, %v1331, 0.0
        %v1455 = vsel %vm1306, %v1335, 0.0
        %v1456 = vsel %vm1307, %v1323, 0.0
        %v1457 = vsel %vm1308, %v1327, 0.0
        %v1458 = vsel %vm1309, %v1331, 0.0
        %v1459 = vsel %vm1310, %v1335, 0.0
        %v1460 = vsel %vm1311, %v1323, 0.0
        %v1461 = vsel %vm1312, %v1327, 0.0
        %v1462 = vsel %vm1313, %v1331, 0.0
        %v1463 = vsel %vm1314, %v1335, 0.0
        %v1464 = vsel %vm1315, %v1323, 0.0
        %v1465 = vsel %vm1316, %v1327, 0.0
        %v1466 = vsel %vm1317, %v1331, 0.0
        %v1467 = vsel %vm1318, %v1335, 0.0
        %v1468 = vadd.f32 %v1047, %v1340
        %v1469 = vadd.f32 %v1048, %v1341
        %v1470 = vadd.f32 %v1049, %v1342
        %v1471 = vadd.f32 %v1050, %v1343
        %v1472 = vadd.f32 %v1051, %v1344
        %v1473 = vadd.f32 %v1052, %v1345
        %v1474 = vadd.f32 %v1053, %v1346
        %v1475 = vadd.f32 %v1054, %v1347
        %v1476 = vadd.f32 %v1055, %v1348
        %v1477 = vadd.f32 %v1056, %v1349
        %v1478 = vadd.f32 %v1057, %v1350
        %v1479 = vadd.f32 %v1058, %v1351
        %v1480 = vadd.f32 %v1059, %v1352
        %v1481 = vadd.f32 %v1060, %v1353
        %v1482 = vadd.f32 %v1061, %v1354
        %v1483 = vadd.f32 %v1062, %v1355
        %v1484 = vadd.f32 %v1063, %v1356
        %v1485 = vadd.f32 %v1064, %v1357
        %v1486 = vadd.f32 %v1065, %v1358
        %v1487 = vadd.f32 %v1066, %v1359
        %v1488 = vadd.f32 %v1067, %v1360
        %v1489 = vadd.f32 %v1068, %v1361
        %v1490 = vadd.f32 %v1069, %v1362
        %v1491 = vadd.f32 %v1070, %v1363
        %v1492 = vadd.f32 %v1071, %v1364
        %v1493 = vadd.f32 %v1072, %v1365
        %v1494 = vadd.f32 %v1073, %v1366
        %v1495 = vadd.f32 %v1074, %v1367
        %v1496 = vadd.f32 %v1075, %v1368
        %v1497 = vadd.f32 %v1076, %v1369
        %v1498 = vadd.f32 %v1077, %v1370
        %v1499 = vadd.f32 %v1078, %v1371
        %v1500 = vadd.f32 %v1079, %v1372
        %v1501 = vadd.f32 %v1080, %v1373
        %v1502 = vadd.f32 %v1081, %v1374
        %v1503 = vadd.f32 %v1082, %v1375
        %v1504 = vadd.f32 %v1083, %v1376
        %v1505 = vadd.f32 %v1084, %v1377
        %v1506 = vadd.f32 %v1085, %v1378
        %v1507 = vadd.f32 %v1086, %v1379
        %v1508 = vadd.f32 %v1087, %v1380
        %v1509 = vadd.f32 %v1088, %v1381
        %v1510 = vadd.f32 %v1089, %v1382
        %v1511 = vadd.f32 %v1090, %v1383
        %v1512 = vadd.f32 %v1091, %v1384
        %v1513 = vadd.f32 %v1092, %v1385
        %v1514 = vadd.f32 %v1093, %v1386
        %v1515 = vadd.f32 %v1094, %v1387
        %v1516 = vadd.f32 %v1095, %v1388
        %v1517 = vadd.f32 %v1096, %v1389
        %v1518 = vadd.f32 %v1097, %v1390
        %v1519 = vadd.f32 %v1098, %v1391
        %v1520 = vadd.f32 %v1099, %v1392
        %v1521 = vadd.f32 %v1100, %v1393
        %v1522 = vadd.f32 %v1101, %v1394
        %v1523 = vadd.f32 %v1102, %v1395
        %v1524 = vadd.f32 %v1103, %v1396
        %v1525 = vadd.f32 %v1104, %v1397
        %v1526 = vadd.f32 %v1105, %v1398
        %v1527 = vadd.f32 %v1106, %v1399
        %v1528 = vadd.f32 %v1107, %v1400
        %v1529 = vadd.f32 %v1108, %v1401
        %v1530 = vadd.f32 %v1109, %v1402
        %v1531 = vadd.f32 %v1110, %v1403
        %v1532 = vadd.f32 %v1111, %v1404
        %v1533 = vadd.f32 %v1112, %v1405
        %v1534 = vadd.f32 %v1113, %v1406
        %v1535 = vadd.f32 %v1114, %v1407
        %v1536 = vadd.f32 %v1115, %v1408
        %v1537 = vadd.f32 %v1116, %v1409
        %v1538 = vadd.f32 %v1117, %v1410
        %v1539 = vadd.f32 %v1118, %v1411
        %v1540 = vadd.f32 %v1119, %v1412
        %v1541 = vadd.f32 %v1120, %v1413
        %v1542 = vadd.f32 %v1121, %v1414
        %v1543 = vadd.f32 %v1122, %v1415
        %v1544 = vadd.f32 %v1123, %v1416
        %v1545 = vadd.f32 %v1124, %v1417
        %v1546 = vadd.f32 %v1125, %v1418
        %v1547 = vadd.f32 %v1126, %v1419
        %v1548 = vadd.f32 %v1127, %v1420
        %v1549 = vadd.f32 %v1128, %v1421
        %v1550 = vadd.f32 %v1129, %v1422
        %v1551 = vadd.f32 %v1130, %v1423
        %v1552 = vadd.f32 %v1131, %v1424
        %v1553 = vadd.f32 %v1132, %v1425
        %v1554 = vadd.f32 %v1133, %v1426
        %v1555 = vadd.f32 %v1134, %v1427
        %v1556 = vadd.f32 %v1135, %v1428
        %v1557 = vadd.f32 %v1136, %v1429
        %v1558 = vadd.f32 %v1137, %v1430
        %v1559 = vadd.f32 %v1138, %v1431
        %v1560 = vadd.f32 %v1139, %v1432
        %v1561 = vadd.f32 %v1140, %v1433
        %v1562 = vadd.f32 %v1141, %v1434
        %v1563 = vadd.f32 %v1142, %v1435
        %v1564 = vadd.f32 %v1143, %v1436
        %v1565 = vadd.f32 %v1144, %v1437
        %v1566 = vadd.f32 %v1145, %v1438
        %v1567 = vadd.f32 %v1146, %v1439
        %v1568 = vadd.f32 %v1147, %v1440
        %v1569 = vadd.f32 %v1148, %v1441
        %v1570 = vadd.f32 %v1149, %v1442
        %v1571 = vadd.f32 %v1150, %v1443
        %v1572 = vadd.f32 %v1151, %v1444
        %v1573 = vadd.f32 %v1152, %v1445
        %v1574 = vadd.f32 %v1153, %v1446
        %v1575 = vadd.f32 %v1154, %v1447
        %v1576 = vadd.f32 %v1155, %v1448
        %v1577 = vadd.f32 %v1156, %v1449
        %v1578 = vadd.f32 %v1157, %v1450
        %v1579 = vadd.f32 %v1158, %v1451
        %v1580 = vadd.f32 %v1159, %v1452
        %v1581 = vadd.f32 %v1160, %v1453
        %v1582 = vadd.f32 %v1161, %v1454
        %v1583 = vadd.f32 %v1162, %v1455
        %v1584 = vadd.f32 %v1163, %v1456
        %v1585 = vadd.f32 %v1164, %v1457
        %v1586 = vadd.f32 %v1165, %v1458
        %v1587 = vadd.f32 %v1166, %v1459
        %v1588 = vadd.f32 %v1167, %v1460
        %v1589 = vadd.f32 %v1168, %v1461
        %v1590 = vadd.f32 %v1169, %v1462
        %v1591 = vadd.f32 %v1170, %v1463
        %v1592 = vadd.f32 %v1171, %v1464
        %v1593 = vadd.f32 %v1172, %v1465
        %v1594 = vadd.f32 %v1173, %v1466
        %v1595 = vadd.f32 %v1174, %v1467
        %v1596 = vlaneseq
        %v1597 = vshrl.u32 %v1596, 7
        %v1598 = vsub.s32 0, %v1597
        %v1599 = vrot.slane %v427, %v1598
        %v1600 = vlaneseq
        %v1601 = vshrl.u32 %v1600, 7
        %v1602 = vsub.s32 1, %v1601
        %v1603 = vrot.slane %v427, %v1602
        %v1604 = vlaneseq
        %v1605 = vshrl.u32 %v1604, 7
        %v1606 = vsub.s32 2, %v1605
        %v1607 = vrot.slane %v427, %v1606
        %v1608 = vlaneseq
        %v1609 = vshrl.u32 %v1608, 7
        %v1610 = vsub.s32 3, %v1609
        %v1611 = vrot.slane %v427, %v1610
        %vm1612 = vcmp.eq.s32.totalorder %v429, %v1599
        %vm1613 = vcmp.eq.s32.totalorder %v429, %v1603
        %vm1614 = vcmp.eq.s32.totalorder %v429, %v1607
        %vm1615 = vcmp.eq.s32.totalorder %v429, %v1611
        %vm1616 = vcmp.eq.s32.totalorder %v430, %v1599
        %vm1617 = vcmp.eq.s32.totalorder %v430, %v1603
        %vm1618 = vcmp.eq.s32.totalorder %v430, %v1607
        %vm1619 = vcmp.eq.s32.totalorder %v430, %v1611
        %vm1620 = vcmp.eq.s32.totalorder %v431, %v1599
        %vm1621 = vcmp.eq.s32.totalorder %v431, %v1603
        %vm1622 = vcmp.eq.s32.totalorder %v431, %v1607
        %vm1623 = vcmp.eq.s32.totalorder %v431, %v1611
        %vm1624 = vcmp.eq.s32.totalorder %v432, %v1599
        %vm1625 = vcmp.eq.s32.totalorder %v432, %v1603
        %vm1626 = vcmp.eq.s32.totalorder %v432, %v1607
        %vm1627 = vcmp.eq.s32.totalorder %v432, %v1611
        %vm1628 = vcmp.eq.s32.totalorder %v433, %v1599
        %vm1629 = vcmp.eq.s32.totalorder %v433, %v1603
        %vm1630 = vcmp.eq.s32.totalorder %v433, %v1607
        %vm1631 = vcmp.eq.s32.totalorder %v433, %v1611
        %vm1632 = vcmp.eq.s32.totalorder %v434, %v1599
        %vm1633 = vcmp.eq.s32.totalorder %v434, %v1603
        %vm1634 = vcmp.eq.s32.totalorder %v434, %v1607
        %vm1635 = vcmp.eq.s32.totalorder %v434, %v1611
        %vm1636 = vcmp.eq.s32.totalorder %v435, %v1599
        %vm1637 = vcmp.eq.s32.totalorder %v435, %v1603
        %vm1638 = vcmp.eq.s32.totalorder %v435, %v1607
        %vm1639 = vcmp.eq.s32.totalorder %v435, %v1611
        %vm1640 = vcmp.eq.s32.totalorder %v436, %v1599
        %vm1641 = vcmp.eq.s32.totalorder %v436, %v1603
        %vm1642 = vcmp.eq.s32.totalorder %v436, %v1607
        %vm1643 = vcmp.eq.s32.totalorder %v436, %v1611
        %vm1644 = vcmp.eq.s32.totalorder %v437, %v1599
        %vm1645 = vcmp.eq.s32.totalorder %v437, %v1603
        %vm1646 = vcmp.eq.s32.totalorder %v437, %v1607
        %vm1647 = vcmp.eq.s32.totalorder %v437, %v1611
        %vm1648 = vcmp.eq.s32.totalorder %v438, %v1599
        %vm1649 = vcmp.eq.s32.totalorder %v438, %v1603
        %vm1650 = vcmp.eq.s32.totalorder %v438, %v1607
        %vm1651 = vcmp.eq.s32.totalorder %v438, %v1611
        %vm1652 = vcmp.eq.s32.totalorder %v439, %v1599
        %vm1653 = vcmp.eq.s32.totalorder %v439, %v1603
        %vm1654 = vcmp.eq.s32.totalorder %v439, %v1607
        %vm1655 = vcmp.eq.s32.totalorder %v439, %v1611
        %vm1656 = vcmp.eq.s32.totalorder %v440, %v1599
        %vm1657 = vcmp.eq.s32.totalorder %v440, %v1603
        %vm1658 = vcmp.eq.s32.totalorder %v440, %v1607
        %vm1659 = vcmp.eq.s32.totalorder %v440, %v1611
        %vm1660 = vcmp.eq.s32.totalorder %v441, %v1599
        %vm1661 = vcmp.eq.s32.totalorder %v441, %v1603
        %vm1662 = vcmp.eq.s32.totalorder %v441, %v1607
        %vm1663 = vcmp.eq.s32.totalorder %v441, %v1611
        %vm1664 = vcmp.eq.s32.totalorder %v442, %v1599
        %vm1665 = vcmp.eq.s32.totalorder %v442, %v1603
        %vm1666 = vcmp.eq.s32.totalorder %v442, %v1607
        %vm1667 = vcmp.eq.s32.totalorder %v442, %v1611
        %vm1668 = vcmp.eq.s32.totalorder %v443, %v1599
        %vm1669 = vcmp.eq.s32.totalorder %v443, %v1603
        %vm1670 = vcmp.eq.s32.totalorder %v443, %v1607
        %vm1671 = vcmp.eq.s32.totalorder %v443, %v1611
        %vm1672 = vcmp.eq.s32.totalorder %v444, %v1599
        %vm1673 = vcmp.eq.s32.totalorder %v444, %v1603
        %vm1674 = vcmp.eq.s32.totalorder %v444, %v1607
        %vm1675 = vcmp.eq.s32.totalorder %v444, %v1611
        %vm1676 = vcmp.eq.s32.totalorder %v445, %v1599
        %vm1677 = vcmp.eq.s32.totalorder %v445, %v1603
        %vm1678 = vcmp.eq.s32.totalorder %v445, %v1607
        %vm1679 = vcmp.eq.s32.totalorder %v445, %v1611
        %vm1680 = vcmp.eq.s32.totalorder %v446, %v1599
        %vm1681 = vcmp.eq.s32.totalorder %v446, %v1603
        %vm1682 = vcmp.eq.s32.totalorder %v446, %v1607
        %vm1683 = vcmp.eq.s32.totalorder %v446, %v1611
        %vm1684 = vcmp.eq.s32.totalorder %v447, %v1599
        %vm1685 = vcmp.eq.s32.totalorder %v447, %v1603
        %vm1686 = vcmp.eq.s32.totalorder %v447, %v1607
        %vm1687 = vcmp.eq.s32.totalorder %v447, %v1611
        %vm1688 = vcmp.eq.s32.totalorder %v448, %v1599
        %vm1689 = vcmp.eq.s32.totalorder %v448, %v1603
        %vm1690 = vcmp.eq.s32.totalorder %v448, %v1607
        %vm1691 = vcmp.eq.s32.totalorder %v448, %v1611
        %vm1692 = vcmp.eq.s32.totalorder %v449, %v1599
        %vm1693 = vcmp.eq.s32.totalorder %v449, %v1603
        %vm1694 = vcmp.eq.s32.totalorder %v449, %v1607
        %vm1695 = vcmp.eq.s32.totalorder %v449, %v1611
        %vm1696 = vcmp.eq.s32.totalorder %v450, %v1599
        %vm1697 = vcmp.eq.s32.totalorder %v450, %v1603
        %vm1698 = vcmp.eq.s32.totalorder %v450, %v1607
        %vm1699 = vcmp.eq.s32.totalorder %v450, %v1611
        %vm1700 = vcmp.eq.s32.totalorder %v451, %v1599
        %vm1701 = vcmp.eq.s32.totalorder %v451, %v1603
        %vm1702 = vcmp.eq.s32.totalorder %v451, %v1607
        %vm1703 = vcmp.eq.s32.totalorder %v451, %v1611
        %vm1704 = vcmp.eq.s32.totalorder %v452, %v1599
        %vm1705 = vcmp.eq.s32.totalorder %v452, %v1603
        %vm1706 = vcmp.eq.s32.totalorder %v452, %v1607
        %vm1707 = vcmp.eq.s32.totalorder %v452, %v1611
        %vm1708 = vcmp.eq.s32.totalorder %v453, %v1599
        %vm1709 = vcmp.eq.s32.totalorder %v453, %v1603
        %vm1710 = vcmp.eq.s32.totalorder %v453, %v1607
        %vm1711 = vcmp.eq.s32.totalorder %v453, %v1611
        %vm1712 = vcmp.eq.s32.totalorder %v454, %v1599
        %vm1713 = vcmp.eq.s32.totalorder %v454, %v1603
        %vm1714 = vcmp.eq.s32.totalorder %v454, %v1607
        %vm1715 = vcmp.eq.s32.totalorder %v454, %v1611
        %vm1716 = vcmp.eq.s32.totalorder %v455, %v1599
        %vm1717 = vcmp.eq.s32.totalorder %v455, %v1603
        %vm1718 = vcmp.eq.s32.totalorder %v455, %v1607
        %vm1719 = vcmp.eq.s32.totalorder %v455, %v1611
        %vm1720 = vcmp.eq.s32.totalorder %v456, %v1599
        %vm1721 = vcmp.eq.s32.totalorder %v456, %v1603
        %vm1722 = vcmp.eq.s32.totalorder %v456, %v1607
        %vm1723 = vcmp.eq.s32.totalorder %v456, %v1611
        %vm1724 = vcmp.eq.s32.totalorder %v457, %v1599
        %vm1725 = vcmp.eq.s32.totalorder %v457, %v1603
        %vm1726 = vcmp.eq.s32.totalorder %v457, %v1607
        %vm1727 = vcmp.eq.s32.totalorder %v457, %v1611
        %vm1728 = vcmp.eq.s32.totalorder %v458, %v1599
        %vm1729 = vcmp.eq.s32.totalorder %v458, %v1603
        %vm1730 = vcmp.eq.s32.totalorder %v458, %v1607
        %vm1731 = vcmp.eq.s32.totalorder %v458, %v1611
        %vm1732 = vcmp.eq.s32.totalorder %v459, %v1599
        %vm1733 = vcmp.eq.s32.totalorder %v459, %v1603
        %vm1734 = vcmp.eq.s32.totalorder %v459, %v1607
        %vm1735 = vcmp.eq.s32.totalorder %v459, %v1611
        %vm1736 = vcmp.eq.s32.totalorder %v460, %v1599
        %vm1737 = vcmp.eq.s32.totalorder %v460, %v1603
        %vm1738 = vcmp.eq.s32.totalorder %v460, %v1607
        %vm1739 = vcmp.eq.s32.totalorder %v460, %v1611
        %v1741 = vlaneseq
        %v1742 = vshrl.u32 %v1741, 7
        %v1743 = vsub.s32 0, %v1742
        %v1744 = vrot.slane %v426, %v1743
        %v1745 = vlaneseq
        %v1746 = vshrl.u32 %v1745, 7
        %v1747 = vsub.s32 1, %v1746
        %v1748 = vrot.slane %v426, %v1747
        %v1749 = vlaneseq
        %v1750 = vshrl.u32 %v1749, 7
        %v1751 = vsub.s32 2, %v1750
        %v1752 = vrot.slane %v426, %v1751
        %v1753 = vlaneseq
        %v1754 = vshrl.u32 %v1753, 7
        %v1755 = vsub.s32 3, %v1754
        %v1756 = vrot.slane %v426, %v1755
        %v1761 = vsel %vm1612, %v1744, 0.0
        %v1762 = vsel %vm1613, %v1748, 0.0
        %v1763 = vsel %vm1614, %v1752, 0.0
        %v1764 = vsel %vm1615, %v1756, 0.0
        %v1765 = vsel %vm1616, %v1744, 0.0
        %v1766 = vsel %vm1617, %v1748, 0.0
        %v1767 = vsel %vm1618, %v1752, 0.0
        %v1768 = vsel %vm1619, %v1756, 0.0
        %v1769 = vsel %vm1620, %v1744, 0.0
        %v1770 = vsel %vm1621, %v1748, 0.0
        %v1771 = vsel %vm1622, %v1752, 0.0
        %v1772 = vsel %vm1623, %v1756, 0.0
        %v1773 = vsel %vm1624, %v1744, 0.0
        %v1774 = vsel %vm1625, %v1748, 0.0
        %v1775 = vsel %vm1626, %v1752, 0.0
        %v1776 = vsel %vm1627, %v1756, 0.0
        %v1777 = vsel %vm1628, %v1744, 0.0
        %v1778 = vsel %vm1629, %v1748, 0.0
        %v1779 = vsel %vm1630, %v1752, 0.0
        %v1780 = vsel %vm1631, %v1756, 0.0
        %v1781 = vsel %vm1632, %v1744, 0.0
        %v1782 = vsel %vm1633, %v1748, 0.0
        %v1783 = vsel %vm1634, %v1752, 0.0
        %v1784 = vsel %vm1635, %v1756, 0.0
        %v1785 = vsel %vm1636, %v1744, 0.0
        %v1786 = vsel %vm1637, %v1748, 0.0
        %v1787 = vsel %vm1638, %v1752, 0.0
        %v1788 = vsel %vm1639, %v1756, 0.0
        %v1789 = vsel %vm1640, %v1744, 0.0
        %v1790 = vsel %vm1641, %v1748, 0.0
        %v1791 = vsel %vm1642, %v1752, 0.0
        %v1792 = vsel %vm1643, %v1756, 0.0
        %v1793 = vsel %vm1644, %v1744, 0.0
        %v1794 = vsel %vm1645, %v1748, 0.0
        %v1795 = vsel %vm1646, %v1752, 0.0
        %v1796 = vsel %vm1647, %v1756, 0.0
        %v1797 = vsel %vm1648, %v1744, 0.0
        %v1798 = vsel %vm1649, %v1748, 0.0
        %v1799 = vsel %vm1650, %v1752, 0.0
        %v1800 = vsel %vm1651, %v1756, 0.0
        %v1801 = vsel %vm1652, %v1744, 0.0
        %v1802 = vsel %vm1653, %v1748, 0.0
        %v1803 = vsel %vm1654, %v1752, 0.0
        %v1804 = vsel %vm1655, %v1756, 0.0
        %v1805 = vsel %vm1656, %v1744, 0.0
        %v1806 = vsel %vm1657, %v1748, 0.0
        %v1807 = vsel %vm1658, %v1752, 0.0
        %v1808 = vsel %vm1659, %v1756, 0.0
        %v1809 = vsel %vm1660, %v1744, 0.0
        %v1810 = vsel %vm1661, %v1748, 0.0
        %v1811 = vsel %vm1662, %v1752, 0.0
        %v1812 = vsel %vm1663, %v1756, 0.0
        %v1813 = vsel %vm1664, %v1744, 0.0
        %v1814 = vsel %vm1665, %v1748, 0.0
        %v1815 = vsel %vm1666, %v1752, 0.0
        %v1816 = vsel %vm1667, %v1756, 0.0
        %v1817 = vsel %vm1668, %v1744, 0.0
        %v1818 = vsel %vm1669, %v1748, 0.0
        %v1819 = vsel %vm1670, %v1752, 0.0
        %v1820 = vsel %vm1671, %v1756, 0.0
        %v1821 = vsel %vm1672, %v1744, 0.0
        %v1822 = vsel %vm1673, %v1748, 0.0
        %v1823 = vsel %vm1674, %v1752, 0.0
        %v1824 = vsel %vm1675, %v1756, 0.0
        %v1825 = vsel %vm1676, %v1744, 0.0
        %v1826 = vsel %vm1677, %v1748, 0.0
        %v1827 = vsel %vm1678, %v1752, 0.0
        %v1828 = vsel %vm1679, %v1756, 0.0
        %v1829 = vsel %vm1680, %v1744, 0.0
        %v1830 = vsel %vm1681, %v1748, 0.0
        %v1831 = vsel %vm1682, %v1752, 0.0
        %v1832 = vsel %vm1683, %v1756, 0.0
        %v1833 = vsel %vm1684, %v1744, 0.0
        %v1834 = vsel %vm1685, %v1748, 0.0
        %v1835 = vsel %vm1686, %v1752, 0.0
        %v1836 = vsel %vm1687, %v1756, 0.0
        %v1837 = vsel %vm1688, %v1744, 0.0
        %v1838 = vsel %vm1689, %v1748, 0.0
        %v1839 = vsel %vm1690, %v1752, 0.0
        %v1840 = vsel %vm1691, %v1756, 0.0
        %v1841 = vsel %vm1692, %v1744, 0.0
        %v1842 = vsel %vm1693, %v1748, 0.0
        %v1843 = vsel %vm1694, %v1752, 0.0
        %v1844 = vsel %vm1695, %v1756, 0.0
        %v1845 = vsel %vm1696, %v1744, 0.0
        %v1846 = vsel %vm1697, %v1748, 0.0
        %v1847 = vsel %vm1698, %v1752, 0.0
        %v1848 = vsel %vm1699, %v1756, 0.0
        %v1849 = vsel %vm1700, %v1744, 0.0
        %v1850 = vsel %vm1701, %v1748, 0.0
        %v1851 = vsel %vm1702, %v1752, 0.0
        %v1852 = vsel %vm1703, %v1756, 0.0
        %v1853 = vsel %vm1704, %v1744, 0.0
        %v1854 = vsel %vm1705, %v1748, 0.0
        %v1855 = vsel %vm1706, %v1752, 0.0
        %v1856 = vsel %vm1707, %v1756, 0.0
        %v1857 = vsel %vm1708, %v1744, 0.0
        %v1858 = vsel %vm1709, %v1748, 0.0
        %v1859 = vsel %vm1710, %v1752, 0.0
        %v1860 = vsel %vm1711, %v1756, 0.0
        %v1861 = vsel %vm1712, %v1744, 0.0
        %v1862 = vsel %vm1713, %v1748, 0.0
        %v1863 = vsel %vm1714, %v1752, 0.0
        %v1864 = vsel %vm1715, %v1756, 0.0
        %v1865 = vsel %vm1716, %v1744, 0.0
        %v1866 = vsel %vm1717, %v1748, 0.0
        %v1867 = vsel %vm1718, %v1752, 0.0
        %v1868 = vsel %vm1719, %v1756, 0.0
        %v1869 = vsel %vm1720, %v1744, 0.0
        %v1870 = vsel %vm1721, %v1748, 0.0
        %v1871 = vsel %vm1722, %v1752, 0.0
        %v1872 = vsel %vm1723, %v1756, 0.0
        %v1873 = vsel %vm1724, %v1744, 0.0
        %v1874 = vsel %vm1725, %v1748, 0.0
        %v1875 = vsel %vm1726, %v1752, 0.0
        %v1876 = vsel %vm1727, %v1756, 0.0
        %v1877 = vsel %vm1728, %v1744, 0.0
        %v1878 = vsel %vm1729, %v1748, 0.0
        %v1879 = vsel %vm1730, %v1752, 0.0
        %v1880 = vsel %vm1731, %v1756, 0.0
        %v1881 = vsel %vm1732, %v1744, 0.0
        %v1882 = vsel %vm1733, %v1748, 0.0
        %v1883 = vsel %vm1734, %v1752, 0.0
        %v1884 = vsel %vm1735, %v1756, 0.0
        %v1885 = vsel %vm1736, %v1744, 0.0
        %v1886 = vsel %vm1737, %v1748, 0.0
        %v1887 = vsel %vm1738, %v1752, 0.0
        %v1888 = vsel %vm1739, %v1756, 0.0
        %v1889 = vadd.f32 %v1468, %v1761
        %v1890 = vadd.f32 %v1469, %v1762
        %v1891 = vadd.f32 %v1470, %v1763
        %v1892 = vadd.f32 %v1471, %v1764
        %v1893 = vadd.f32 %v1472, %v1765
        %v1894 = vadd.f32 %v1473, %v1766
        %v1895 = vadd.f32 %v1474, %v1767
        %v1896 = vadd.f32 %v1475, %v1768
        %v1897 = vadd.f32 %v1476, %v1769
        %v1898 = vadd.f32 %v1477, %v1770
        %v1899 = vadd.f32 %v1478, %v1771
        %v1900 = vadd.f32 %v1479, %v1772
        %v1901 = vadd.f32 %v1480, %v1773
        %v1902 = vadd.f32 %v1481, %v1774
        %v1903 = vadd.f32 %v1482, %v1775
        %v1904 = vadd.f32 %v1483, %v1776
        %v1905 = vadd.f32 %v1484, %v1777
        %v1906 = vadd.f32 %v1485, %v1778
        %v1907 = vadd.f32 %v1486, %v1779
        %v1908 = vadd.f32 %v1487, %v1780
        %v1909 = vadd.f32 %v1488, %v1781
        %v1910 = vadd.f32 %v1489, %v1782
        %v1911 = vadd.f32 %v1490, %v1783
        %v1912 = vadd.f32 %v1491, %v1784
        %v1913 = vadd.f32 %v1492, %v1785
        %v1914 = vadd.f32 %v1493, %v1786
        %v1915 = vadd.f32 %v1494, %v1787
        %v1916 = vadd.f32 %v1495, %v1788
        %v1917 = vadd.f32 %v1496, %v1789
        %v1918 = vadd.f32 %v1497, %v1790
        %v1919 = vadd.f32 %v1498, %v1791
        %v1920 = vadd.f32 %v1499, %v1792
        %v1921 = vadd.f32 %v1500, %v1793
        %v1922 = vadd.f32 %v1501, %v1794
        %v1923 = vadd.f32 %v1502, %v1795
        %v1924 = vadd.f32 %v1503, %v1796
        %v1925 = vadd.f32 %v1504, %v1797
        %v1926 = vadd.f32 %v1505, %v1798
        %v1927 = vadd.f32 %v1506, %v1799
        %v1928 = vadd.f32 %v1507, %v1800
        %v1929 = vadd.f32 %v1508, %v1801
        %v1930 = vadd.f32 %v1509, %v1802
        %v1931 = vadd.f32 %v1510, %v1803
        %v1932 = vadd.f32 %v1511, %v1804
        %v1933 = vadd.f32 %v1512, %v1805
        %v1934 = vadd.f32 %v1513, %v1806
        %v1935 = vadd.f32 %v1514, %v1807
        %v1936 = vadd.f32 %v1515, %v1808
        %v1937 = vadd.f32 %v1516, %v1809
        %v1938 = vadd.f32 %v1517, %v1810
        %v1939 = vadd.f32 %v1518, %v1811
        %v1940 = vadd.f32 %v1519, %v1812
        %v1941 = vadd.f32 %v1520, %v1813
        %v1942 = vadd.f32 %v1521, %v1814
        %v1943 = vadd.f32 %v1522, %v1815
        %v1944 = vadd.f32 %v1523, %v1816
        %v1945 = vadd.f32 %v1524, %v1817
        %v1946 = vadd.f32 %v1525, %v1818
        %v1947 = vadd.f32 %v1526, %v1819
        %v1948 = vadd.f32 %v1527, %v1820
        %v1949 = vadd.f32 %v1528, %v1821
        %v1950 = vadd.f32 %v1529, %v1822
        %v1951 = vadd.f32 %v1530, %v1823
        %v1952 = vadd.f32 %v1531, %v1824
        %v1953 = vadd.f32 %v1532, %v1825
        %v1954 = vadd.f32 %v1533, %v1826
        %v1955 = vadd.f32 %v1534, %v1827
        %v1956 = vadd.f32 %v1535, %v1828
        %v1957 = vadd.f32 %v1536, %v1829
        %v1958 = vadd.f32 %v1537, %v1830
        %v1959 = vadd.f32 %v1538, %v1831
        %v1960 = vadd.f32 %v1539, %v1832
        %v1961 = vadd.f32 %v1540, %v1833
        %v1962 = vadd.f32 %v1541, %v1834
        %v1963 = vadd.f32 %v1542, %v1835
        %v1964 = vadd.f32 %v1543, %v1836
        %v1965 = vadd.f32 %v1544, %v1837
        %v1966 = vadd.f32 %v1545, %v1838
        %v1967 = vadd.f32 %v1546, %v1839
        %v1968 = vadd.f32 %v1547, %v1840
        %v1969 = vadd.f32 %v1548, %v1841
        %v1970 = vadd.f32 %v1549, %v1842
        %v1971 = vadd.f32 %v1550, %v1843
        %v1972 = vadd.f32 %v1551, %v1844
        %v1973 = vadd.f32 %v1552, %v1845
        %v1974 = vadd.f32 %v1553, %v1846
        %v1975 = vadd.f32 %v1554, %v1847
        %v1976 = vadd.f32 %v1555, %v1848
        %v1977 = vadd.f32 %v1556, %v1849
        %v1978 = vadd.f32 %v1557, %v1850
        %v1979 = vadd.f32 %v1558, %v1851
        %v1980 = vadd.f32 %v1559, %v1852
        %v1981 = vadd.f32 %v1560, %v1853
        %v1982 = vadd.f32 %v1561, %v1854
        %v1983 = vadd.f32 %v1562, %v1855
        %v1984 = vadd.f32 %v1563, %v1856
        %v1985 = vadd.f32 %v1564, %v1857
        %v1986 = vadd.f32 %v1565, %v1858
        %v1987 = vadd.f32 %v1566, %v1859
        %v1988 = vadd.f32 %v1567, %v1860
        %v1989 = vadd.f32 %v1568, %v1861
        %v1990 = vadd.f32 %v1569, %v1862
        %v1991 = vadd.f32 %v1570, %v1863
        %v1992 = vadd.f32 %v1571, %v1864
        %v1993 = vadd.f32 %v1572, %v1865
        %v1994 = vadd.f32 %v1573, %v1866
        %v1995 = vadd.f32 %v1574, %v1867
        %v1996 = vadd.f32 %v1575, %v1868
        %v1997 = vadd.f32 %v1576, %v1869
        %v1998 = vadd.f32 %v1577, %v1870
        %v1999 = vadd.f32 %v1578, %v1871
        %v2000 = vadd.f32 %v1579, %v1872
        %v2001 = vadd.f32 %v1580, %v1873
        %v2002 = vadd.f32 %v1581, %v1874
        %v2003 = vadd.f32 %v1582, %v1875
        %v2004 = vadd.f32 %v1583, %v1876
        %v2005 = vadd.f32 %v1584, %v1877
        %v2006 = vadd.f32 %v1585, %v1878
        %v2007 = vadd.f32 %v1586, %v1879
        %v2008 = vadd.f32 %v1587, %v1880
        %v2009 = vadd.f32 %v1588, %v1881
        %v2010 = vadd.f32 %v1589, %v1882
        %v2011 = vadd.f32 %v1590, %v1883
        %v2012 = vadd.f32 %v1591, %v1884
        %v2013 = vadd.f32 %v1592, %v1885
        %v2014 = vadd.f32 %v1593, %v1886
        %v2015 = vadd.f32 %v1594, %v1887
        %v2016 = vadd.f32 %v1595, %v1888
        %v2017 = vld [vmem:[%s330] sm:$0xff]
        %v2019 = vcombine.high %v2017, %v2017
        %2021 = vmatprep.subr.mxu0 %v1890
        %2022 = vmatpush1.msra.mxu0 %v1889
        %2023 = vmatprep.subr.mxu0 %v1894
        %2024 = vmatpush1.msra.mxu0 %v1893
        %2025 = vmatprep.subr.mxu0 %v1898
        %2026 = vmatpush1.msra.mxu0 %v1897
        %2027 = vmatprep.subr.mxu0 %v1902
        %2028 = vmatpush1.msra.mxu0 %v1901
        %2029 = vmatprep.subr.mxu0 %v1906
        %2030 = vmatpush1.msra.mxu0 %v1905
        %2031 = vmatprep.subr.mxu0 %v1910
        %2032 = vmatpush1.msra.mxu0 %v1909
        %2033 = vmatprep.subr.mxu0 %v1914
        %2034 = vmatpush1.msra.mxu0 %v1913
        %2035 = vmatprep.subr.mxu0 %v1918
        %2036 = vmatpush1.msra.mxu0 %v1917
        %2037 = vmatprep.subr.mxu0 %v1922
        %2038 = vmatpush1.msra.mxu0 %v1921
        %2039 = vmatprep.subr.mxu0 %v1926
        %2040 = vmatpush1.msra.mxu0 %v1925
        %2041 = vmatprep.subr.mxu0 %v1930
        %2042 = vmatpush1.msra.mxu0 %v1929
        %2043 = vmatprep.subr.mxu0 %v1934
        %2044 = vmatpush1.msra.mxu0 %v1933
        %2045 = vmatprep.subr.mxu0 %v1938
        %2046 = vmatpush1.msra.mxu0 %v1937
        %2047 = vmatprep.subr.mxu0 %v1942
        %2048 = vmatpush1.msra.mxu0 %v1941
        %2049 = vmatprep.subr.mxu0 %v1946
        %2050 = vmatpush1.msra.mxu0 %v1945
        %2051 = vmatprep.subr.mxu0 %v1950
        %2052 = vmatpush1.msra.mxu0 %v1949
        %2053 = vmatprep.subr.mxu0 %v1954
        %2054 = vmatpush1.msra.mxu0 %v1953
        %2055 = vmatprep.subr.mxu0 %v1958
        %2056 = vmatpush1.msra.mxu0 %v1957
        %2057 = vmatprep.subr.mxu0 %v1962
        %2058 = vmatpush1.msra.mxu0 %v1961
        %2059 = vmatprep.subr.mxu0 %v1966
        %2060 = vmatpush1.msra.mxu0 %v1965
        %2061 = vmatprep.subr.mxu0 %v1970
        %2062 = vmatpush1.msra.mxu0 %v1969
        %2063 = vmatprep.subr.mxu0 %v1974
        %2064 = vmatpush1.msra.mxu0 %v1973
        %2065 = vmatprep.subr.mxu0 %v1978
        %2066 = vmatpush1.msra.mxu0 %v1977
        %2067 = vmatprep.subr.mxu0 %v1982
        %2068 = vmatpush1.msra.mxu0 %v1981
        %2069 = vmatprep.subr.mxu0 %v1986
        %2070 = vmatpush1.msra.mxu0 %v1985
        %2071 = vmatprep.subr.mxu0 %v1990
        %2072 = vmatpush1.msra.mxu0 %v1989
        %2073 = vmatprep.subr.mxu0 %v1994
        %2074 = vmatpush1.msra.mxu0 %v1993
        %2075 = vmatprep.subr.mxu0 %v1998
        %2076 = vmatpush1.msra.mxu0 %v1997
        %2077 = vmatprep.subr.mxu0 %v2002
        %2078 = vmatpush1.msra.mxu0 %v2001
        %2079 = vmatprep.subr.mxu0 %v2006
        %2080 = vmatpush1.msra.mxu0 %v2005
        %2081 = vmatprep.subr.mxu0 %v2010
        %2082 = vmatpush1.msra.mxu0 %v2009
        %2083 = vmatprep.subr.mxu0 %v2014
        %2084 = vmatpush1.msra.mxu0 %v2013
        %2085 = vmatprep.mubr.f32.mxu0 %v2019
        %2086 = vmatmul.mubr.f32.gmra.mrb[0].mxu0 %v2017
        %v2087 = vpop.f32.mrb[0].mxu0
        %v2088 = vadd.f32 0.0, %v2087
        %v2089 = vpop.f32.mrb[0].mxu0
        %v2090 = vadd.f32 0.0, %v2089
        %2091 = vdwg.mxu0
        %2092 = vmatprep.subr.mxu0 %v1892
        %2093 = vmatpush1.msra.mxu0 %v1891
        %2094 = vmatprep.subr.mxu0 %v1896
        %2095 = vmatpush1.msra.mxu0 %v1895
        %2096 = vmatprep.subr.mxu0 %v1900
        %2097 = vmatpush1.msra.mxu0 %v1899
        %2098 = vmatprep.subr.mxu0 %v1904
        %2099 = vmatpush1.msra.mxu0 %v1903
        %2100 = vmatprep.subr.mxu0 %v1908
        %2101 = vmatpush1.msra.mxu0 %v1907
        %2102 = vmatprep.subr.mxu0 %v1912
        %2103 = vmatpush1.msra.mxu0 %v1911
        %2104 = vmatprep.subr.mxu0 %v1916
        %2105 = vmatpush1.msra.mxu0 %v1915
        %2106 = vmatprep.subr.mxu0 %v1920
        %2107 = vmatpush1.msra.mxu0 %v1919
        %2108 = vmatprep.subr.mxu0 %v1924
        %2109 = vmatpush1.msra.mxu0 %v1923
        %2110 = vmatprep.subr.mxu0 %v1928
        %2111 = vmatpush1.msra.mxu0 %v1927
        %2112 = vmatprep.subr.mxu0 %v1932
        %2113 = vmatpush1.msra.mxu0 %v1931
        %2114 = vmatprep.subr.mxu0 %v1936
        %2115 = vmatpush1.msra.mxu0 %v1935
        %2116 = vmatprep.subr.mxu0 %v1940
        %2117 = vmatpush1.msra.mxu0 %v1939
        %2118 = vmatprep.subr.mxu0 %v1944
        %2119 = vmatpush1.msra.mxu0 %v1943
        %2120 = vmatprep.subr.mxu0 %v1948
        %2121 = vmatpush1.msra.mxu0 %v1947
        %2122 = vmatprep.subr.mxu0 %v1952
        %2123 = vmatpush1.msra.mxu0 %v1951
        %2124 = vmatprep.subr.mxu0 %v1956
        %2125 = vmatpush1.msra.mxu0 %v1955
        %2126 = vmatprep.subr.mxu0 %v1960
        %2127 = vmatpush1.msra.mxu0 %v1959
        %2128 = vmatprep.subr.mxu0 %v1964
        %2129 = vmatpush1.msra.mxu0 %v1963
        %2130 = vmatprep.subr.mxu0 %v1968
        %2131 = vmatpush1.msra.mxu0 %v1967
        %2132 = vmatprep.subr.mxu0 %v1972
        %2133 = vmatpush1.msra.mxu0 %v1971
        %2134 = vmatprep.subr.mxu0 %v1976
        %2135 = vmatpush1.msra.mxu0 %v1975
        %2136 = vmatprep.subr.mxu0 %v1980
        %2137 = vmatpush1.msra.mxu0 %v1979
        %2138 = vmatprep.subr.mxu0 %v1984
        %2139 = vmatpush1.msra.mxu0 %v1983
        %2140 = vmatprep.subr.mxu0 %v1988
        %2141 = vmatpush1.msra.mxu0 %v1987
        %2142 = vmatprep.subr.mxu0 %v1992
        %2143 = vmatpush1.msra.mxu0 %v1991
        %2144 = vmatprep.subr.mxu0 %v1996
        %2145 = vmatpush1.msra.mxu0 %v1995
        %2146 = vmatprep.subr.mxu0 %v2000
        %2147 = vmatpush1.msra.mxu0 %v1999
        %2148 = vmatprep.subr.mxu0 %v2004
        %2149 = vmatpush1.msra.mxu0 %v2003
        %2150 = vmatprep.subr.mxu0 %v2008
        %2151 = vmatpush1.msra.mxu0 %v2007
        %2152 = vmatprep.subr.mxu0 %v2012
        %2153 = vmatpush1.msra.mxu0 %v2011
        %2154 = vmatprep.subr.mxu0 %v2016
        %2155 = vmatpush1.msra.mxu0 %v2015
        %2156 = vmatprep.mubr.f32.mxu0 %v2019
        %2157 = vmatmul.mubr.f32.gmra.mrb[0].mxu0 %v2017
        %v2158 = vpop.f32.mrb[0].mxu0
        %v2159 = vadd.f32 0.0, %v2158
        %v2160 = vpop.f32.mrb[0].mxu0
        %v2161 = vadd.f32 0.0, %v2160
        %2162 = vdwg.mxu0
        %p2163 = scmp.eq.s32.totalorder %s34, 0
        // Predicated region
        $region53: #{tpu_custom_call.1} parent=35 // pred_check
          %p2164 = pneg %p2163
        $region54: #{tpu_custom_call.1} parent=35 // pred_check_branch
          %2166 = sbr.rel (%p2164) target = $region56
        $region55: #{tpu_custom_call.1} parent=35 // pred_region
          %v2171 = vcombine.low %v2088, %v2090
          %v2172 = vcombine.low %v2159, %v2161
          %2175 = vst [vmem:[%s369] sm:$0xff] %v2171
          %2176 = vst [vmem:[%s369 + $0x8] sm:$0xff] %v2172
        $region56: #{tpu_custom_call.1} parent=35 // pred_fallthru
          _
        %p2177 = scmp.gt.s32.totalorder %s34, 0
        // Predicated region
        $region57: #{tpu_custom_call.1} parent=35 // pred_check
          %p2178 = pneg %p2177
        $region58: #{tpu_custom_call.1} parent=35 // pred_check_branch
          %2180 = sbr.rel (%p2178) target = $region60
        $region59: #{tpu_custom_call.1} parent=35 // pred_region
          %v2181 = vld [vmem:[%s369] sm:$0xff]
          %v2182 = vld [vmem:[%s369 + $0x8] sm:$0xff]
          %v2187 = vcombine.low %v2088, %v2090
          %v2188 = vcombine.low %v2159, %v2161
          %v2191 = vadd.f32 %v2181, %v2187
          %v2192 = vadd.f32 %v2182, %v2188
          %2193 = vst [vmem:[%s369] sm:$0xff] %v2191
          %2194 = vst [vmem:[%s369 + $0x8] sm:$0xff] %v2192
        $region60: #{tpu_custom_call.1} parent=35 // pred_fallthru
          _
        %p2195 = scmp.eq.s32.totalorder %s34, 2
        // Predicated region
        $region61: #{tpu_custom_call.1} parent=35 // pred_check
          %p2196 = pneg %p2195
        $region62: #{tpu_custom_call.1} parent=35 // pred_check_branch
          %2198 = sbr.rel (%p2196) target = $region64
        $region63: #{tpu_custom_call.1} parent=35 // pred_region
          %v2199 = vld [vmem:[%s369] sm:$0xff]
          %v2200 = vld [vmem:[%s369 + $0x8] sm:$0xff]
          %v2201 = vld [vmem:[%s321] sm:$0xf]
          %v2203 = vlaneseq
          %v2204 = vshrl.u32 %v2203, 7
          %v2205 = vsub.s32 0, %v2204
          %v2206 = vrot.slane %v2201, %v2205
          %v2207 = vlaneseq
          %v2208 = vshrl.u32 %v2207, 7
          %v2209 = vsub.s32 1, %v2208
          %v2210 = vrot.slane %v2201, %v2209
          %v2211 = vlaneseq
          %v2212 = vshrl.u32 %v2211, 7
          %v2213 = vsub.s32 2, %v2212
          %v2214 = vrot.slane %v2201, %v2213
          %v2215 = vlaneseq
          %v2216 = vshrl.u32 %v2215, 7
          %v2217 = vsub.s32 3, %v2216
          %v2218 = vrot.slane %v2201, %v2217
          %v2219 = vcombine.low %v2206, %v2210
          %v2220 = vcombine.low %v2214, %v2218
          %v2223 = vmul.f32 %v2199, %v2219
          %v2224 = vmul.f32 %v2200, %v2220
          %vm2225 = vcmp.ne.f32.partialorder %v2223, %v2223
          %vm2226 = vcmp.ne.f32.partialorder %v2224, %v2224
          %v2227 = vsel %vm2225, 0.0, %v2223
          %v2228 = vsel %vm2226, 0.0, %v2224
          %v2229 = vmax.f32 %v2227, 0.0
          %v2230 = vmax.f32 %v2228, 0.0
          %v2231 = vmin.f32 %v2229, 1.0
          %v2232 = vmin.f32 %v2230, 1.0
          %2233 = vst [vmem:[%s369] sm:$0xff] %v2231
          %2234 = vst [vmem:[%s369 + $0x8] sm:$0xff] %v2232
        $region64: #{tpu_custom_call.1} parent=35 // pred_fallthru
          _
        %s2235 = sand.u32 %s172, 1
        %s2236 = scalar_lea.sflag [#allocation4], %s2235
        %s2237 = sand.u32 %s172, 1
        %s2238 = smul.addr %s2237, 16
        %s2239 = scalar_lea.vmem [#allocation10], %s2238
        // Predicated region
        $region65: #{tpu_custom_call.1} parent=35 // pred_check
          %p2240 = pneg %p182
        $region66: #{tpu_custom_call.1} parent=35 // pred_check_branch
          %2242 = sbr.rel (%p2240) target = $region68
        $region67: #{tpu_custom_call.1} parent=35 // pred_region
          %s2243 = smul.u32 4, %s33
          %s2245 = ssub.s32 256, 256
          %2246 = vsyncadd %s2236, %s2245
          %s2247 = smul.addr %s32, 4
          %s2248 = sadd.s32 %s2243, %s2247
          %s2249 = smul.addr %s2248, 64
          %s2250 = scalar_lea.hbm %s4, %s2249
          %s2252 = sshll.u32 %s2239, 4
          %s2253 = int_to_ptr.vmem [resolvable:$true] %s2252
          %2255 = dma.vmem_to_hbm [thread:$0]  %s2253, 256, %s2250, %s2236
        $region68: #{tpu_custom_call.1} parent=35 // pred_fallthru
          _
      $region36: #{tpu_custom_call.1} parent=5 // pred_fallthru
        _
      %p2256 = scmp.le.s32.totalorder 2, %s22
      // Predicated region
      $region69: #{tpu_custom_call.1} parent=5 // pred_check
        %p2257 = pneg %p2256
      $region70: #{tpu_custom_call.1} parent=5 // pred_check_branch
        %2259 = sbr.rel (%p2257) target = $region72
      $region71: #{tpu_custom_call.1} parent=5 // pred_region
        %s2260 = ssub.s32 %s22, 2
        // Predicated region
        $region73: #{tpu_custom_call.1} parent=71 // pred_check
          %p2261 = pneg %p188
        $region74: #{tpu_custom_call.1} parent=71 // pred_check_branch
          %2263 = sbr.rel (%p2261) target = $region76
        $region75: #{tpu_custom_call.1} parent=71 // pred_region
          %s2264 = sand.u32 %s173, 1
          %s2265 = scalar_lea.sflag [#allocation4], %s2264
          %s2266 = sand.u32 %s173, 1
          %s2267 = smul.addr %s2266, 16
          %s2268 = scalar_lea.vmem [#allocation10], %s2267
          %2269 = dma.done %s2265, 256
        $region76: #{tpu_custom_call.1} parent=71 // pred_fallthru
          _
      $region72: #{tpu_custom_call.1} parent=5 // pred_fallthru
        _
    $region6: #{tpu_custom_call.1} parent=1 // loop_footer
      %s26 = sadd.s32 1, %s22
    $region7: #{tpu_custom_call.1} parent=1 // loop_footer_branch
      %21 = sbr.rel target = $region3
    $region8: #{tpu_custom_call.1} parent=1 // loop_exit
      _
    %2270 = vsyncpa [#allocation3], 1
    %s2271 = scalar_lea.sflag [#allocation3], 1
    %2272 = vsyncpa %s2271, 1
    %2273 = vsyncpa [#allocation6], 1
    %s2274 = scalar_lea.sflag [#allocation6], 1
    %2275 = vsyncpa %s2274, 1
    %2276 = vsyncpa [#allocation9], 1
    %s2277 = scalar_lea.sflag [#allocation9], 1
    %2278 = vsyncpa %s2277, 1
    %2279 = vsyncpa [#allocation4], 1
    %s2280 = scalar_lea.sflag [#allocation4], 1
    %2281 = vsyncpa %s2280, 1

</llo_original>
